<compile_context>
chip_gen: v7x
topology: tpu7x:2x2x1
jax: 0.10.0
libtpu: 0.0.40
codegen_flags: <defaults>
</compile_context>

<pallas_src>
import functools

import jax
import jax.numpy as jnp
from jax.experimental import pallas as pl
from jax.experimental.pallas import tpu as pltpu

T_STEPS = 8          # netParams['simulation']['tSample'] (small, free parameter)
THETA = 10.0         # netParams['neuron']['theta'] (SLAYER default)
TAU_SR = 4.0         # netParams['neuron']['tauSr']
W_SCALE = 100.0      # SLAYER dense weightScale default

C_IN = 3 * 32 * 32   # 3072 = fc1 inFeatures (32, 32, 3)
H1, H1_PAD = 410, 512
H2, H2_PAD = 100, 128
TK = 1024            # K-chunk for the fc1 contraction (3072 = 3 * 1024)


def srm_kernel_matrix_t(T, tau):
    """KT[t, s] = eps(t - s), alpha SRM kernel eps(d) = d/tau * e^(1 - d/tau), causal."""
    t = jnp.arange(T, dtype=jnp.float32)
    d = t[:, None] - t[None, :]                       # d[t, s] = t - s
    eps = (d / tau) * jnp.exp(1.0 - d / tau)
    return jnp.where(d >= 0.0, eps, 0.0).astype(jnp.float32)


def _mlp_kernel(x_ref, w1_ref, kt_ref, w2_ref, o_ref, u1_acc, *, theta, t_steps):
    k = pl.program_id(0)

    # --- fc1, K-split: accumulate one (1, 512) row of membrane potential ---
    @pl.when(k == 0)
    def _():
        u1_acc[...] = jnp.zeros_like(u1_acc)

    u1_acc[...] += jnp.dot(x_ref[...], w1_ref[...],
                           preferred_element_type=jnp.float32)            # (1, 512) f32

    # --- psp1 / spike1 / fc2 / psp2 / spike2 on the last K step ---
    @pl.when(k == pl.num_programs(0) - 1)
    def _():
        kt = kt_ref[...]                                                  # (T, T) f32
        # replicate(): all T rows of u1 are identical, so KT @ u1 == rowsum(KT) * u1_row.
        kt_sum = jnp.sum(kt, axis=1, keepdims=True)                       # (T, 1)  f32
        p1 = kt_sum * u1_acc[...]                                         # (T, 512) f32, VPU
        s1 = (p1 >= theta).astype(jnp.bfloat16)                           # {0,1}, lossless

        u2 = jnp.dot(s1, w2_ref[...], preferred_element_type=jnp.float32)  # (T, 128) f32
        p2 = jnp.dot(kt, u2, preferred_element_type=jnp.float32,
                     precision=jax.lax.Precision.HIGHEST)                  # (T, 128) f32
        o_ref[...] = (p2 >= theta).astype(jnp.float32)


def network_interpolation_mlp_forward(x_img, params):
    """params must hold the PRE-PADDED bf16 weights + SRM matrix from init_params."""
    T = T_STEPS
    # Flatten the frame in (C, H, W) order (SLAYER dense over (W, H, C) flattens the
    # same contiguous block; weights here are synthetic so the order is a convention).
    x_flat = x_img.reshape(1, C_IN).astype(jnp.bfloat16)                  # (1, 3072)

    w1p = params['w1p']                                                   # (3072, 512) bf16
    w2p = params['w2p']                                                   # (512, 128)  bf16
    kt = params['kt']                                                     # (T, T)      f32

    kern = functools.partial(_mlp_kernel, theta=THETA, t_steps=T)
    flops = (2 * C_IN * H1_PAD            # fc1 (M=1)
             + T * H1_PAD                 # psp1 as VPU scale
             + 2 * T * H1_PAD * H2_PAD    # fc2
             + 2 * T * T * H2_PAD)        # psp2
    bytes_accessed = (x_flat.size * 2 + w1p.size * 2 + w2p.size * 2
                      + kt.size * 4 + T * H2_PAD * 4)

    out = pl.pallas_call(
        kern,
        out_shape=jax.ShapeDtypeStruct((T, H2_PAD), jnp.float32),
        grid=(C_IN // TK,),
        in_specs=[pl.BlockSpec((1, TK), lambda k: (0, k)),                # x chunk
                  pl.BlockSpec((TK, H1_PAD), lambda k: (k, 0)),           # w1 chunk (streamed)
                  pl.BlockSpec((T, T), lambda k: (0, 0)),                 # KT (resident)
                  pl.BlockSpec((H1_PAD, H2_PAD), lambda k: (0, 0))],      # w2 (resident)
        out_specs=pl.BlockSpec((T, H2_PAD), lambda k: (0, 0)),
        scratch_shapes=[pltpu.VMEM((1, H1_PAD), jnp.float32)],            # u1 accumulator
        compiler_params=pltpu.CompilerParams(
            dimension_semantics=("arbitrary",)),
        cost_estimate=pl.CostEstimate(
            flops=flops, transcendentals=0, bytes_accessed=bytes_accessed),
    )(x_flat, w1p, kt, w2p)

    spikes = out[:, :H2]                                                  # (T, 100)
    return spikes.T.reshape(1, H2, 1, 1, T)                               # (1, 100, 1, 1, T)


def init_params(key):
    """Deterministic synthetic weights, SLAYER-style fan-in scaling * weightScale.

    All weight preprocessing (transpose, bf16 cast, 128-lane zero padding) and the
    SRM temporal-filter matrix are done HERE, once, so the per-call forward does no
    weight-side HBM work. Zero padding is exact for theta > 0: padded fc1 columns
    give u=0 -> psp=0 -> spike=0, and the matching fc2 rows are zero.
    """
    k1, k2 = jax.random.split(key)
    fc1_w = (W_SCALE / jnp.sqrt(C_IN)) * jax.random.normal(k1, (H1, C_IN), jnp.float32)
    fc2_w = (W_SCALE / jnp.sqrt(H1)) * jax.random.normal(k2, (H2, H1), jnp.float32)

    w1 = fc1_w.T.astype(jnp.bfloat16)                                     # (3072, 410)
    w2 = fc2_w.T.astype(jnp.bfloat16)                                     # (410, 100)
    w1p = jnp.zeros((C_IN, H1_PAD), jnp.bfloat16).at[:, :H1].set(w1)
    w2p = jnp.zeros((H1_PAD, H2_PAD), jnp.bfloat16).at[:H1, :H2].set(w2)
    kt = srm_kernel_matrix_t(T_STEPS, TAU_SR)                             # (T, T) f32
    return dict(w1p=w1p, w2p=w2p, kt=kt)


if __name__ == "__main__":
    key = jax.random.PRNGKey(0)
    kx, kp = jax.random.split(key)
    x = jax.random.uniform(kx, (1, 3, 32, 32), jnp.float32)   # CIFAR-like intensities
    params = jax.tree.map(jax.block_until_ready, init_params(kp))  # one-time weight prep

    fwd = jax.jit(network_interpolation_mlp_forward)
    out = jax.block_until_ready(fwd(x, params))

    assert out.shape == (1, H2, 1, 1, T_STEPS), out.shape
    assert out.dtype == jnp.float32
    assert bool(jnp.all((out == 0.0) | (out == 1.0)))          # spikes are binary
    # TODO(synk): SLAYER's spike() also defines a surrogate gradient; only the
    # Heaviside forward is implemented here.
    print("KERNEL_OK")
</pallas_src>

<mosaic_0001>
module attributes {stable_mosaic.version = 11 : i64} {
  func.func @_mlp_kernel(%arg0: i32, %arg1: memref<1x1024xbf16, #tpu.memory_space<vmem>>, %arg2: memref<1024x512xbf16, #tpu.memory_space<vmem>>, %arg3: memref<8x8xf32, #tpu.memory_space<vmem>>, %arg4: memref<512x128xbf16, #tpu.memory_space<vmem>>, %arg5: memref<8x128xf32, #tpu.memory_space<vmem>>, %arg6: memref<1x512xf32, #tpu.memory_space<vmem>>) attributes {dimension_semantics = [#tpu.dimension_semantics<arbitrary>], iteration_bounds = array<i64: 3>, scalar_prefetch = 0 : i64, scratch_operands = 1 : i64, tpu.core_type = #tpu.core_type<tc>, window_params = [{transform_indices = @transform_0, window_bounds = array<i64: 1, 1024>}, {transform_indices = @transform_1, window_bounds = array<i64: 1024, 512>}, {pipeline_mode = #tpu.pipeline_mode<synchronous>, transform_indices = @transform_2, window_bounds = array<i64: 8, 8>}, {pipeline_mode = #tpu.pipeline_mode<synchronous>, transform_indices = @transform_3, window_bounds = array<i64: 512, 128>}, {pipeline_mode = #tpu.pipeline_mode<synchronous>, transform_indices = @transform_4, window_bounds = array<i64: 8, 128>}]} {
    %c0_i32 = arith.constant 0 : i32
    %0 = arith.cmpi eq, %arg0, %c0_i32 : i32
    %1 = arith.extui %0 : i1 to i32
    %c0_i32_0 = arith.constant 0 : i32
    %2 = arith.cmpi ne, %1, %c0_i32_0 : i32
    scf.if %2 {
      %cst_9 = arith.constant 0.000000e+00 : f32
      %12 = vector.broadcast %cst_9 : f32 to vector<1x512xf32>
      %c0_10 = arith.constant 0 : index
      %c0_11 = arith.constant 0 : index
      %13 = vector.load %arg6[%c0_10, %c0_11] : memref<1x512xf32, #tpu.memory_space<vmem>>, vector<1x512xf32>
      tpu.vector_store %arg6[%c0_10, %c0_11], %12 {strides = array<i32>} : memref<1x512xf32, #tpu.memory_space<vmem>>, vector<1x512xf32>,
    } else {
    }
    %c0 = arith.constant 0 : index
    %c0_1 = arith.constant 0 : index
    %3 = vector.load %arg6[%c0, %c0_1] : memref<1x512xf32, #tpu.memory_space<vmem>>, vector<1x512xf32>
    %c0_2 = arith.constant 0 : index
    %c0_3 = arith.constant 0 : index
    %4 = vector.load %arg1[%c0_2, %c0_3] : memref<1x1024xbf16, #tpu.memory_space<vmem>>, vector<1x1024xbf16>
    %c0_4 = arith.constant 0 : index
    %c0_5 = arith.constant 0 : index
    %5 = vector.load %arg2[%c0_4, %c0_5] : memref<1024x512xbf16, #tpu.memory_space<vmem>>, vector<1024x512xbf16>
    %cst = arith.constant dense<0.000000e+00> : vector<1x512xf32>
    %6 = tpu.matmul %4, %5, %cst {dimension_numbers = #tpu.dot_dimension_numbers<[1], [0], [0], [1], [0, 0, 1, 1], [], []>} : vector<1x1024xbf16>, vector<1024x512xbf16>, vector<1x512xf32> -> vector<1x512xf32>
    %7 = arith.addf %3, %6 : vector<1x512xf32>
    %c0_6 = arith.constant 0 : index
    %c0_7 = arith.constant 0 : index
    %8 = vector.load %arg6[%c0_6, %c0_7] : memref<1x512xf32, #tpu.memory_space<vmem>>, vector<1x512xf32>
    tpu.vector_store %arg6[%c0_6, %c0_7], %7 {strides = array<i32>} : memref<1x512xf32, #tpu.memory_space<vmem>>, vector<1x512xf32>,
    %c2_i32 = arith.constant 2 : i32
    %9 = arith.cmpi eq, %arg0, %c2_i32 : i32
    %10 = arith.extui %9 : i1 to i32
    %c0_i32_8 = arith.constant 0 : i32
    %11 = arith.cmpi ne, %10, %c0_i32_8 : i32
    scf.if %11 {
      %c0_9 = arith.constant 0 : index
      %c0_10 = arith.constant 0 : index
      %12 = vector.load %arg3[%c0_9, %c0_10] : memref<8x8xf32, #tpu.memory_space<vmem>>, vector<8x8xf32>
      %cst_11 = arith.constant dense<0.000000e+00> : vector<8xf32>
      %13 = vector.multi_reduction <add>, %12, %cst_11 [1] : vector<8x8xf32> to vector<8xf32>
      %14 = vector.shape_cast %13 : vector<8xf32> to vector<8x1xf32>
      %c0_12 = arith.constant 0 : index
      %c0_13 = arith.constant 0 : index
      %15 = vector.load %arg6[%c0_12, %c0_13] : memref<1x512xf32, #tpu.memory_space<vmem>>, vector<1x512xf32>
      %16 = vector.broadcast %14 : vector<8x1xf32> to vector<8x512xf32>
      %17 = vector.broadcast %15 : vector<1x512xf32> to vector<8x512xf32>
      %18 = arith.mulf %16, %17 : vector<8x512xf32>
      %cst_14 = arith.constant 1.000000e+01 : f32
      %19 = vector.broadcast %cst_14 : f32 to vector<8x512xf32>
      %20 = arith.cmpf oge, %18, %19 : vector<8x512xf32>
      %21 = arith.extui %20 : vector<8x512xi1> to vector<8x512xi32>
      %22 = arith.sitofp %21 : vector<8x512xi32> to vector<8x512xf32>
      %23 = arith.truncf %22 : vector<8x512xf32> to vector<8x512xbf16>
      %c0_15 = arith.constant 0 : index
      %c0_16 = arith.constant 0 : index
      %24 = vector.load %arg4[%c0_15, %c0_16] : memref<512x128xbf16, #tpu.memory_space<vmem>>, vector<512x128xbf16>
      %cst_17 = arith.constant dense<0.000000e+00> : vector<8x128xf32>
      %25 = tpu.matmul %23, %24, %cst_17 {dimension_numbers = #tpu.dot_dimension_numbers<[1], [0], [0], [1], [0, 0, 1, 1], [], []>} : vector<8x512xbf16>, vector<512x128xbf16>, vector<8x128xf32> -> vector<8x128xf32>
      %cst_18 = arith.constant dense<0.000000e+00> : vector<8x128xf32>
      %26 = tpu.matmul %12, %25, %cst_18 {dimension_numbers = #tpu.dot_dimension_numbers<[1], [0], [0], [1], [0, 0, 1, 1], [], []>, precision = #tpu.contract_precision<fp32>} : vector<8x8xf32>, vector<8x128xf32>, vector<8x128xf32> -> vector<8x128xf32>
      %cst_19 = arith.constant 1.000000e+01 : f32
      %27 = vector.broadcast %cst_19 : f32 to vector<8x128xf32>
      %28 = arith.cmpf oge, %26, %27 : vector<8x128xf32>
      %29 = arith.extui %28 : vector<8x128xi1> to vector<8x128xi32>
      %30 = arith.sitofp %29 : vector<8x128xi32> to vector<8x128xf32>
      %c0_20 = arith.constant 0 : index
      %c0_21 = arith.constant 0 : index
      %31 = vector.load %arg5[%c0_20, %c0_21] : memref<8x128xf32, #tpu.memory_space<vmem>>, vector<8x128xf32>
      tpu.vector_store %arg5[%c0_20, %c0_21], %30 {strides = array<i32>} : memref<8x128xf32, #tpu.memory_space<vmem>>, vector<8x128xf32>,
    } else {
    }
    return
  }
  func.func @transform_0(%arg0: i32) -> (i32, i32) {
    %c0_i32 = arith.constant 0 : i32
    %c0_i32_0 = arith.constant 0 : i32
    return %c0_i32, %arg0 : i32, i32
  }
  func.func @transform_1(%arg0: i32) -> (i32, i32) {
    %c0_i32 = arith.constant 0 : i32
    %c0_i32_0 = arith.constant 0 : i32
    return %arg0, %c0_i32 : i32, i32
  }
  func.func @transform_2(%arg0: i32) -> (i32, i32) {
    %c0_i32 = arith.constant 0 : i32
    %c0_i32_0 = arith.constant 0 : i32
    %c0_i32_1 = arith.constant 0 : i32
    return %c0_i32, %c0_i32_0 : i32, i32
  }
  func.func @transform_3(%arg0: i32) -> (i32, i32) {
    %c0_i32 = arith.constant 0 : i32
    %c0_i32_0 = arith.constant 0 : i32
    %c0_i32_1 = arith.constant 0 : i32
    return %c0_i32, %c0_i32_0 : i32, i32
  }
  func.func @transform_4(%arg0: i32) -> (i32, i32) {
    %c0_i32 = arith.constant 0 : i32
    %c0_i32_0 = arith.constant 0 : i32
    %c0_i32_1 = arith.constant 0 : i32
    return %c0_i32, %c0_i32_0 : i32, i32
  }
}

</mosaic_0001>

<llo_original>
// kernel: network_interpolation_mlp_forward.1
$region0: #{network_interpolation_mlp_forward.1}
  #allocation0 [shape = 'u32[]', space=smem, size = 0x4, offset = 0x4, fixed_abs, tag = 'smem constant byte address 0x4 - core index']
  #allocation1 [shape = 'u32[144,128]{1,0:T(1,128)}', space=vmem, size = 0x12000, scoped, tag = 'internal scratch']
  #allocation2 [shape = 'f32[1,512]{1,0:T(1,128)}', space=vmem, size = 0x800, scoped, tag = 'scratch operand']
  %s0 = inlined_call_operand.vmem [shape: bf16[1,3072], index: 0, kind: input, shape index: {}]
  %s1 = inlined_call_operand.hbm [shape: bf16[3072,512], index: 1, kind: input, shape index: {}]
  %s2 = inlined_call_operand.hbm [shape: f32[8,8], index: 2, kind: input, shape index: {}]
  %s3 = inlined_call_operand.hbm [shape: bf16[512,128], index: 3, kind: input, shape index: {}]
  %s4 = inlined_call_operand.vmem [shape: f32[8,128], index: 4, kind: output, shape index: {}]
  %s5 = sld [smem:[#allocation0]]
  $region69: #{network_interpolation_mlp_forward.1} parent=0
    _
  %s7 = ssub.s32 1, %s5
  %s8 = scalar_select 0, %s7, %s5
  $region1: #{network_interpolation_mlp_forward.1} parent=0
    #allocation3 [shape = 'u8[2097152]{0}', space=vmem, size = 0x200000, scoped, tag = 'input window, operand 1']
    #allocation4 [shape = 's32[2]{0}', space=sflag, size = 0x8, scoped, tag = 'scoped memory for network_interpolation_mlp_forward.1']
    #allocation5 [shape = 'u8[4096]{0}', space=vmem, size = 0x1000, scoped, tag = 'input window, operand 2, single buffered']
    #allocation6 [shape = 's32[1]{0}', space=sflag, size = 0x4, scoped, tag = 'scoped memory for network_interpolation_mlp_forward.1']
    #allocation7 [shape = 'u8[131072]{0}', space=vmem, size = 0x20000, scoped, tag = 'input window, operand 3, single buffered']
    %9 = vsyncpa [#allocation4], 0
    %s10 = scalar_lea.sflag [#allocation4], 1
    %11 = vsyncpa %s10, 0
    %12 = vsyncpa [#allocation6], 0
    loop: start=0, step=1, limit=5
    $region2: #{network_interpolation_mlp_forward.1} parent=1 // loop_pre_header
      _
    $region3: #{network_interpolation_mlp_forward.1} parent=1 // loop_header
      %s14 = sphi 0, %s18
      %p15 = scmp.ge.s32.totalorder %s14, 5
      %s24 = sphi 0, %s26
      %s27 = sphi 0, %s24
      %s28 = sphi 0, %s27
      %s44 = sphi 0, %s28
      %s50 = sphi 0, %s52
      %s53 = sphi 0, %s50
      %s54 = sphi 0, %s53
      %s70 = sphi 0, %s54
      %s74 = sphi 0, %s74
      %s76 = sphi 0, %s74
      %s77 = sphi 0, %s76
      %s91 = sphi 0, %s77
      %s95 = sphi 0, %s95
      %s97 = sphi 0, %s95
      %s98 = sphi 0, %s97
      %s112 = sphi 0, %s98
      %s116 = sphi 0, %s116
      %s118 = sphi 0, %s116
      %s119 = sphi 0, %s118
      %s133 = sphi 0, %s119
    $region4: #{network_interpolation_mlp_forward.1} parent=1 // loop_header_branch
      %17 = sbr.rel (%p15) target = $region8
    $region5: #{network_interpolation_mlp_forward.1} parent=1 // loop_body
      %s19 = ssub.s32 %s14, 1
      %s20 = ssub.s32 %s14, 2
      %s21 = sadd.s32 %s14, 1
      %s22 = ssub.s32 %s14, %s21
      %p23 = scmp.eq.s32.totalorder %s22, 0
      %s25 = sadd.s32 %s24, 1
      %s26 = scalar_select %p23, %s24, %s25
      %p29 = pneg %p23
      %p30 = scmp.eq.s32.totalorder %s14, 2
      %p31 = por %p29, %p30
      %p32 = scmp.ne.s32.totalorder %s24, %s27
      %p33 = scmp.eq.s32.totalorder %s14, 0
      %p34 = por %p32, %p33
      %p35 = scmp.ne.s32.totalorder %s24, %s27
      %p36 = scmp.eq.s32.totalorder %s19, 2
      %p37 = por %p35, %p36
      %p38 = scmp.ne.s32.totalorder %s27, %s28
      %p39 = scmp.eq.s32.totalorder %s19, 0
      %p40 = por %p38, %p39
      %p41 = scmp.ne.s32.totalorder %s27, %s28
      %p42 = scmp.eq.s32.totalorder %s20, 2
      %p43 = por %p41, %p42
      %p45 = scmp.ne.s32.totalorder %s28, %s44
      %p46 = scmp.eq.s32.totalorder %s20, 0
      %p47 = por %p45, %p46
      %s48 = ssub.s32 %s14, %s21
      %p49 = scmp.eq.s32.totalorder %s48, 0
      %s51 = sadd.s32 %s50, 1
      %s52 = scalar_select %p49, %s50, %s51
      %p55 = pneg %p49
      %p56 = scmp.eq.s32.totalorder %s14, 2
      %p57 = por %p55, %p56
      %p58 = scmp.ne.s32.totalorder %s50, %s53
      %p59 = scmp.eq.s32.totalorder %s14, 0
      %p60 = por %p58, %p59
      %p61 = scmp.ne.s32.totalorder %s50, %s53
      %p62 = scmp.eq.s32.totalorder %s19, 2
      %p63 = por %p61, %p62
      %p64 = scmp.ne.s32.totalorder %s53, %s54
      %p65 = scmp.eq.s32.totalorder %s19, 0
      %p66 = por %p64, %p65
      %p67 = scmp.ne.s32.totalorder %s53, %s54
      %p68 = scmp.eq.s32.totalorder %s20, 2
      %p69 = por %p67, %p68
      %p71 = scmp.ne.s32.totalorder %s54, %s70
      %p72 = scmp.eq.s32.totalorder %s20, 0
      %p73 = por %p71, %p72
      %s75 = sadd.s32 %s74, 1
      %p78 = scmp.eq.s32.totalorder %s14, 2
      %p79 = scmp.ne.s32.totalorder %s74, %s76
      %p80 = scmp.eq.s32.totalorder %s14, 0
      %p81 = por %p79, %p80
      %p82 = scmp.ne.s32.totalorder %s74, %s76
      %p83 = scmp.eq.s32.totalorder %s19, 2
      %p84 = por %p82, %p83
      %p85 = scmp.ne.s32.totalorder %s76, %s77
      %p86 = scmp.eq.s32.totalorder %s19, 0
      %p87 = por %p85, %p86
      %p88 = scmp.ne.s32.totalorder %s76, %s77
      %p89 = scmp.eq.s32.totalorder %s20, 2
      %p90 = por %p88, %p89
      %p92 = scmp.ne.s32.totalorder %s77, %s91
      %p93 = scmp.eq.s32.totalorder %s20, 0
      %p94 = por %p92, %p93
      %s96 = sadd.s32 %s95, 1
      %p99 = scmp.eq.s32.totalorder %s14, 2
      %p100 = scmp.ne.s32.totalorder %s95, %s97
      %p101 = scmp.eq.s32.totalorder %s14, 0
      %p102 = por %p100, %p101
      %p103 = scmp.ne.s32.totalorder %s95, %s97
      %p104 = scmp.eq.s32.totalorder %s19, 2
      %p105 = por %p103, %p104
      %p106 = scmp.ne.s32.totalorder %s97, %s98
      %p107 = scmp.eq.s32.totalorder %s19, 0
      %p108 = por %p106, %p107
      %p109 = scmp.ne.s32.totalorder %s97, %s98
      %p110 = scmp.eq.s32.totalorder %s20, 2
      %p111 = por %p109, %p110
      %p113 = scmp.ne.s32.totalorder %s98, %s112
      %p114 = scmp.eq.s32.totalorder %s20, 0
      %p115 = por %p113, %p114
      %s117 = sadd.s32 %s116, 1
      %p120 = scmp.eq.s32.totalorder %s14, 2
      %p121 = scmp.ne.s32.totalorder %s116, %s118
      %p122 = scmp.eq.s32.totalorder %s14, 0
      %p123 = por %p121, %p122
      %p124 = scmp.ne.s32.totalorder %s116, %s118
      %p125 = scmp.eq.s32.totalorder %s19, 2
      %p126 = por %p124, %p125
      %p127 = scmp.ne.s32.totalorder %s118, %s119
      %p128 = scmp.eq.s32.totalorder %s19, 0
      %p129 = por %p127, %p128
      %p130 = scmp.ne.s32.totalorder %s118, %s119
      %p131 = scmp.eq.s32.totalorder %s20, 2
      %p132 = por %p130, %p131
      %p134 = scmp.ne.s32.totalorder %s119, %s133
      %p135 = scmp.eq.s32.totalorder %s20, 0
      %p136 = por %p134, %p135
      %p137 = scmp.le.s32.totalorder 1, %s14
      %p138 = scmp.lt.s32.totalorder %s14, 4
      %p139 = pnand %p137, %p138
      %p140 = pneg %p139
      // Predicated region
      $region9: #{network_interpolation_mlp_forward.1} parent=5 // pred_check
        _
      $region10: #{network_interpolation_mlp_forward.1} parent=5 // pred_check_branch
        %142 = sbr.rel (%p139) target = $region12
      $region11: #{network_interpolation_mlp_forward.1} parent=5 // pred_region
        %s143 = ssub.s32 %s14, 1
        // Predicated region
        $region13: #{network_interpolation_mlp_forward.1} parent=11 // pred_check
          %p144 = pneg %p87
        $region14: #{network_interpolation_mlp_forward.1} parent=11 // pred_check_branch
          %146 = sbr.rel (%p144) target = $region16
        $region15: #{network_interpolation_mlp_forward.1} parent=11 // pred_region
          %s148 = ssub.s32 128, 128
          %149 = vsyncadd [#allocation6], %s148
          %s151 = sshll.u32 [#allocation5], 4
          %s152 = int_to_ptr.vmem [resolvable:$true] %s151
          %154 = dma.hbm_to_vmem [thread:$0]  %s2, 128, %s152, [#allocation6]
        $region16: #{network_interpolation_mlp_forward.1} parent=11 // pred_fallthru
          _
        // Predicated region
        $region17: #{network_interpolation_mlp_forward.1} parent=11 // pred_check
          %p155 = pneg %p108
        $region18: #{network_interpolation_mlp_forward.1} parent=11 // pred_check_branch
          %157 = sbr.rel (%p155) target = $region20
        $region19: #{network_interpolation_mlp_forward.1} parent=11 // pred_region
          %s159 = ssub.s32 4096, 4096
          %160 = vsyncadd [#allocation6], %s159
          %s161 = sshll.u32 [#allocation7], 4
          %s162 = int_to_ptr.vmem [resolvable:$true] %s161
          %167 = dma.hbm_to_vmem [thread:$0]  %s3, 4096, %s162, [#allocation6], 64, 64, 4
        $region20: #{network_interpolation_mlp_forward.1} parent=11 // pred_fallthru
          _
      $region12: #{network_interpolation_mlp_forward.1} parent=5 // pred_fallthru
        _
      %p168 = scmp.lt.s32.totalorder %s14, 3
      // Predicated region
      $region21: #{network_interpolation_mlp_forward.1} parent=5 // pred_check
        %p169 = pneg %p168
      $region22: #{network_interpolation_mlp_forward.1} parent=5 // pred_check_branch
        %171 = sbr.rel (%p169) target = $region24
      $region23: #{network_interpolation_mlp_forward.1} parent=5 // pred_region
        // Predicated region
        $region25: #{network_interpolation_mlp_forward.1} parent=23 // pred_check
          %p172 = pneg %p34
        $region26: #{network_interpolation_mlp_forward.1} parent=23 // pred_check_branch
          %174 = sbr.rel (%p172) target = $region28
        $region27: #{network_interpolation_mlp_forward.1} parent=23 // pred_region
          %s175 = smul.u32 8, %s14
          %p176 = scmp.lt.s32.totalorder %s175, 23
          %s177 = scalar_select %p176, %s175, 23
          %s178 = scalar_lea.vmem %s0, %s177
          %s179 = smul.u32 8, %s14
        $region28: #{network_interpolation_mlp_forward.1} parent=23 // pred_fallthru
          _
        // Predicated region
        $region29: #{network_interpolation_mlp_forward.1} parent=23 // pred_check
          %p180 = pneg %p60
        $region30: #{network_interpolation_mlp_forward.1} parent=23 // pred_check_branch
          %182 = sbr.rel (%p180) target = $region32
        $region31: #{network_interpolation_mlp_forward.1} parent=23 // pred_region
          %s183 = sand.u32 %s50, 1
          %s184 = scalar_lea.sflag [#allocation4], %s183
          %s185 = sand.u32 %s50, 1
          %s186 = smul.addr %s185, 2048
          %s187 = scalar_lea.vmem [#allocation3], %s186
          %s188 = smul.u32 128, %s14
          %s190 = ssub.s32 32768, 32768
          %191 = vsyncadd %s184, %s190
          %s192 = smul.addr %s188, 4
          %s193 = smul.addr %s192, 64
          %s194 = scalar_lea.hbm %s1, %s193
          %s195 = sshll.u32 %s187, 4
          %s196 = int_to_ptr.vmem [resolvable:$true] %s195
          %201 = dma.hbm_to_vmem [thread:$0]  %s194, 32768, %s196, %s184, 256, 256, 16
        $region32: #{network_interpolation_mlp_forward.1} parent=23 // pred_fallthru
          _
      $region24: #{network_interpolation_mlp_forward.1} parent=5 // pred_fallthru
        _
      %p202 = scmp.le.s32.totalorder 1, %s14
      %p203 = scmp.lt.s32.totalorder %s14, 4
      %p204 = pnand %p202, %p203
      %p205 = pneg %p204
      // Predicated region
      $region33: #{network_interpolation_mlp_forward.1} parent=5 // pred_check
        _
      $region34: #{network_interpolation_mlp_forward.1} parent=5 // pred_check_branch
        %207 = sbr.rel (%p204) target = $region36
      $region35: #{network_interpolation_mlp_forward.1} parent=5 // pred_region
        %s208 = ssub.s32 %s14, 1
        %s209 = sand.u32 %s53, 1
        %s210 = scalar_lea.sflag [#allocation4], %s209
        %s211 = sand.u32 %s53, 1
        %s212 = smul.addr %s211, 2048
        %s213 = scalar_lea.vmem [#allocation3], %s212
        // Predicated region
        $region37: #{network_interpolation_mlp_forward.1} parent=35 // pred_check
          %p214 = pneg %p66
        $region38: #{network_interpolation_mlp_forward.1} parent=35 // pred_check_branch
          %216 = sbr.rel (%p214) target = $region40
        $region39: #{network_interpolation_mlp_forward.1} parent=35 // pred_region
          %217 = dma.done %s210, 32768
        $region40: #{network_interpolation_mlp_forward.1} parent=35 // pred_fallthru
          _
        // Predicated region
        $region41: #{network_interpolation_mlp_forward.1} parent=35 // pred_check
          %p218 = pneg %p87
        $region42: #{network_interpolation_mlp_forward.1} parent=35 // pred_check_branch
          %220 = sbr.rel (%p218) target = $region44
        $region43: #{network_interpolation_mlp_forward.1} parent=35 // pred_region
          %221 = dma.done [#allocation6], 128
        $region44: #{network_interpolation_mlp_forward.1} parent=35 // pred_fallthru
          _
        // Predicated region
        $region45: #{network_interpolation_mlp_forward.1} parent=35 // pred_check
          %p222 = pneg %p108
        $region46: #{network_interpolation_mlp_forward.1} parent=35 // pred_check_branch
          %224 = sbr.rel (%p222) target = $region48
        $region47: #{network_interpolation_mlp_forward.1} parent=35 // pred_region
          %225 = dma.done [#allocation6], 4096
        $region48: #{network_interpolation_mlp_forward.1} parent=35 // pred_fallthru
          _
        %s226 = smul.u32 8, %s19
        %p227 = scmp.lt.s32.totalorder %s226, 23
        %s228 = scalar_select %p227, %s226, 23
        %s229 = scalar_lea.vmem %s0, %s228
        %p230 = pneg %p40
        %p231 = pneg %p37
        %s232 = sand.u32 %s53, 1
        %s233 = scalar_lea.sflag [#allocation4], %s232
        %s234 = sand.u32 %s53, 1
        %s235 = smul.addr %s234, 2048
        %s236 = scalar_lea.vmem [#allocation3], %s235
        %p237 = pneg %p66
        %p238 = pneg %p63
        %p239 = pneg %p87
        %p240 = pneg %p84
        %p241 = pneg %p108
        %p242 = pneg %p105
        %p243 = pneg %p129
        %p244 = pneg %p126
        %s245 = smul.u32 8, %s19
        %p246 = scmp.lt.s32.totalorder %s245, 23
        %s247 = scalar_select %p246, %s245, 23
        %s248 = scalar_lea.vmem %s0, %s247
        %s249 = smul.u32 8, %s19
        %s250 = smul.u32 128, %s19
        %p252 = scmp.eq.s32.totalorder %s19, 0
        // Predicated region
        $region49: #{network_interpolation_mlp_forward.1} parent=35 // pred_check
          %p253 = pneg %p252
        $region50: #{network_interpolation_mlp_forward.1} parent=35 // pred_check_branch
          %255 = sbr.rel (%p253) target = $region52
        $region51: #{network_interpolation_mlp_forward.1} parent=35 // pred_region
          %v256 = vlaneseq
          %vm257 = vcmp.ge.s32.totalorder %v256, 0
          %vm258 = vcmp.lt.s32.totalorder %v256, 512
          %vm259 = vmand %vm257, %vm258
          %260 = vst.msk [vmem:[#allocation2] sm:$0xf] %vm259, 0.0
        $region52: #{network_interpolation_mlp_forward.1} parent=35 // pred_fallthru
          _
        %v261 = vld [vmem:[#allocation2] sm:$0xf]
        %v262 = vld [vmem:[%s248] sm:$0xff]
        %v263 = vld [vmem:[%s213] sm:$0xff]
        %v264 = vld [vmem:[%s213 + $0x8] sm:$0xff]
        %v265 = vld [vmem:[%s213 + $0x10] sm:$0xff]
        %v266 = vld [vmem:[%s213 + $0x18] sm:$0xff]
        %v267 = vld [vmem:[%s213 + $0x20] sm:$0xff]
        %v268 = vld [vmem:[%s213 + $0x28] sm:$0xff]
        %v269 = vld [vmem:[%s213 + $0x30] sm:$0xff]
        %v270 = vld [vmem:[%s213 + $0x38] sm:$0xff]
        %v271 = vld [vmem:[%s213 + $0x40] sm:$0xff]
        %v272 = vld [vmem:[%s213 + $0x48] sm:$0xff]
        %v273 = vld [vmem:[%s213 + $0x50] sm:$0xff]
        %v274 = vld [vmem:[%s213 + $0x58] sm:$0xff]
        %v275 = vld [vmem:[%s213 + $0x60] sm:$0xff]
        %v276 = vld [vmem:[%s213 + $0x68] sm:$0xff]
        %v277 = vld [vmem:[%s213 + $0x70] sm:$0xff]
        %v278 = vld [vmem:[%s213 + $0x78] sm:$0xff]
        %v279 = vld [vmem:[%s213 + $0x80] sm:$0xff]
        %v280 = vld [vmem:[%s213 + $0x88] sm:$0xff]
        %v281 = vld [vmem:[%s213 + $0x90] sm:$0xff]
        %v282 = vld [vmem:[%s213 + $0x98] sm:$0xff]
        %v283 = vld [vmem:[%s213 + $0xa0] sm:$0xff]
        %v284 = vld [vmem:[%s213 + $0xa8] sm:$0xff]
        %v285 = vld [vmem:[%s213 + $0xb0] sm:$0xff]
        %v286 = vld [vmem:[%s213 + $0xb8] sm:$0xff]
        %v287 = vld [vmem:[%s213 + $0xc0] sm:$0xff]
        %v288 = vld [vmem:[%s213 + $0xc8] sm:$0xff]
        %v289 = vld [vmem:[%s213 + $0xd0] sm:$0xff]
        %v290 = vld [vmem:[%s213 + $0xd8] sm:$0xff]
        %v291 = vld [vmem:[%s213 + $0xe0] sm:$0xff]
        %v292 = vld [vmem:[%s213 + $0xe8] sm:$0xff]
        %v293 = vld [vmem:[%s213 + $0xf0] sm:$0xff]
        %v294 = vld [vmem:[%s213 + $0xf8] sm:$0xff]
        %v295 = vld [vmem:[%s213 + $0x100] sm:$0xff]
        %v296 = vld [vmem:[%s213 + $0x108] sm:$0xff]
        %v297 = vld [vmem:[%s213 + $0x110] sm:$0xff]
        %v298 = vld [vmem:[%s213 + $0x118] sm:$0xff]
        %v299 = vld [vmem:[%s213 + $0x120] sm:$0xff]
        %v300 = vld [vmem:[%s213 + $0x128] sm:$0xff]
        %v301 = vld [vmem:[%s213 + $0x130] sm:$0xff]
        %v302 = vld [vmem:[%s213 + $0x138] sm:$0xff]
        %v303 = vld [vmem:[%s213 + $0x140] sm:$0xff]
        %v304 = vld [vmem:[%s213 + $0x148] sm:$0xff]
        %v305 = vld [vmem:[%s213 + $0x150] sm:$0xff]
        %v306 = vld [vmem:[%s213 + $0x158] sm:$0xff]
        %v307 = vld [vmem:[%s213 + $0x160] sm:$0xff]
        %v308 = vld [vmem:[%s213 + $0x168] sm:$0xff]
        %v309 = vld [vmem:[%s213 + $0x170] sm:$0xff]
        %v310 = vld [vmem:[%s213 + $0x178] sm:$0xff]
        %v311 = vld [vmem:[%s213 + $0x180] sm:$0xff]
        %v312 = vld [vmem:[%s213 + $0x188] sm:$0xff]
        %v313 = vld [vmem:[%s213 + $0x190] sm:$0xff]
        %v314 = vld [vmem:[%s213 + $0x198] sm:$0xff]
        %v315 = vld [vmem:[%s213 + $0x1a0] sm:$0xff]
        %v316 = vld [vmem:[%s213 + $0x1a8] sm:$0xff]
        %v317 = vld [vmem:[%s213 + $0x1b0] sm:$0xff]
        %v318 = vld [vmem:[%s213 + $0x1b8] sm:$0xff]
        %v319 = vld [vmem:[%s213 + $0x1c0] sm:$0xff]
        %v320 = vld [vmem:[%s213 + $0x1c8] sm:$0xff]
        %v321 = vld [vmem:[%s213 + $0x1d0] sm:$0xff]
        %v322 = vld [vmem:[%s213 + $0x1d8] sm:$0xff]
        %v323 = vld [vmem:[%s213 + $0x1e0] sm:$0xff]
        %v324 = vld [vmem:[%s213 + $0x1e8] sm:$0xff]
        %v325 = vld [vmem:[%s213 + $0x1f0] sm:$0xff]
        %v326 = vld [vmem:[%s213 + $0x1f8] sm:$0xff]
        %v327 = vld [vmem:[%s213 + $0x200] sm:$0xff]
        %v328 = vld [vmem:[%s213 + $0x208] sm:$0xff]
        %v329 = vld [vmem:[%s213 + $0x210] sm:$0xff]
        %v330 = vld [vmem:[%s213 + $0x218] sm:$0xff]
        %v331 = vld [vmem:[%s213 + $0x220] sm:$0xff]
        %v332 = vld [vmem:[%s213 + $0x228] sm:$0xff]
        %v333 = vld [vmem:[%s213 + $0x230] sm:$0xff]
        %v334 = vld [vmem:[%s213 + $0x238] sm:$0xff]
        %v335 = vld [vmem:[%s213 + $0x240] sm:$0xff]
        %v336 = vld [vmem:[%s213 + $0x248] sm:$0xff]
        %v337 = vld [vmem:[%s213 + $0x250] sm:$0xff]
        %v338 = vld [vmem:[%s213 + $0x258] sm:$0xff]
        %v339 = vld [vmem:[%s213 + $0x260] sm:$0xff]
        %v340 = vld [vmem:[%s213 + $0x268] sm:$0xff]
        %v341 = vld [vmem:[%s213 + $0x270] sm:$0xff]
        %v342 = vld [vmem:[%s213 + $0x278] sm:$0xff]
        %v343 = vld [vmem:[%s213 + $0x280] sm:$0xff]
        %v344 = vld [vmem:[%s213 + $0x288] sm:$0xff]
        %v345 = vld [vmem:[%s213 + $0x290] sm:$0xff]
        %v346 = vld [vmem:[%s213 + $0x298] sm:$0xff]
        %v347 = vld [vmem:[%s213 + $0x2a0] sm:$0xff]
        %v348 = vld [vmem:[%s213 + $0x2a8] sm:$0xff]
        %v349 = vld [vmem:[%s213 + $0x2b0] sm:$0xff]
        %v350 = vld [vmem:[%s213 + $0x2b8] sm:$0xff]
        %v351 = vld [vmem:[%s213 + $0x2c0] sm:$0xff]
        %v352 = vld [vmem:[%s213 + $0x2c8] sm:$0xff]
        %v353 = vld [vmem:[%s213 + $0x2d0] sm:$0xff]
        %v354 = vld [vmem:[%s213 + $0x2d8] sm:$0xff]
        %v355 = vld [vmem:[%s213 + $0x2e0] sm:$0xff]
        %v356 = vld [vmem:[%s213 + $0x2e8] sm:$0xff]
        %v357 = vld [vmem:[%s213 + $0x2f0] sm:$0xff]
        %v358 = vld [vmem:[%s213 + $0x2f8] sm:$0xff]
        %v359 = vld [vmem:[%s213 + $0x300] sm:$0xff]
        %v360 = vld [vmem:[%s213 + $0x308] sm:$0xff]
        %v361 = vld [vmem:[%s213 + $0x310] sm:$0xff]
        %v362 = vld [vmem:[%s213 + $0x318] sm:$0xff]
        %v363 = vld [vmem:[%s213 + $0x320] sm:$0xff]
        %v364 = vld [vmem:[%s213 + $0x328] sm:$0xff]
        %v365 = vld [vmem:[%s213 + $0x330] sm:$0xff]
        %v366 = vld [vmem:[%s213 + $0x338] sm:$0xff]
        %v367 = vld [vmem:[%s213 + $0x340] sm:$0xff]
        %v368 = vld [vmem:[%s213 + $0x348] sm:$0xff]
        %v369 = vld [vmem:[%s213 + $0x350] sm:$0xff]
        %v370 = vld [vmem:[%s213 + $0x358] sm:$0xff]
        %v371 = vld [vmem:[%s213 + $0x360] sm:$0xff]
        %v372 = vld [vmem:[%s213 + $0x368] sm:$0xff]
        %v373 = vld [vmem:[%s213 + $0x370] sm:$0xff]
        %v374 = vld [vmem:[%s213 + $0x378] sm:$0xff]
        %v375 = vld [vmem:[%s213 + $0x380] sm:$0xff]
        %v376 = vld [vmem:[%s213 + $0x388] sm:$0xff]
        %v377 = vld [vmem:[%s213 + $0x390] sm:$0xff]
        %v378 = vld [vmem:[%s213 + $0x398] sm:$0xff]
        %v379 = vld [vmem:[%s213 + $0x3a0] sm:$0xff]
        %v380 = vld [vmem:[%s213 + $0x3a8] sm:$0xff]
        %v381 = vld [vmem:[%s213 + $0x3b0] sm:$0xff]
        %v382 = vld [vmem:[%s213 + $0x3b8] sm:$0xff]
        %v383 = vld [vmem:[%s213 + $0x3c0] sm:$0xff]
        %v384 = vld [vmem:[%s213 + $0x3c8] sm:$0xff]
        %v385 = vld [vmem:[%s213 + $0x3d0] sm:$0xff]
        %v386 = vld [vmem:[%s213 + $0x3d8] sm:$0xff]
        %v387 = vld [vmem:[%s213 + $0x3e0] sm:$0xff]
        %v388 = vld [vmem:[%s213 + $0x3e8] sm:$0xff]
        %v389 = vld [vmem:[%s213 + $0x3f0] sm:$0xff]
        %v390 = vld [vmem:[%s213 + $0x3f8] sm:$0xff]
        %v391 = vld [vmem:[%s213 + $0x400] sm:$0xff]
        %v392 = vld [vmem:[%s213 + $0x408] sm:$0xff]
        %v393 = vld [vmem:[%s213 + $0x410] sm:$0xff]
        %v394 = vld [vmem:[%s213 + $0x418] sm:$0xff]
        %v395 = vld [vmem:[%s213 + $0x420] sm:$0xff]
        %v396 = vld [vmem:[%s213 + $0x428] sm:$0xff]
        %v397 = vld [vmem:[%s213 + $0x430] sm:$0xff]
        %v398 = vld [vmem:[%s213 + $0x438] sm:$0xff]
        %v399 = vld [vmem:[%s213 + $0x440] sm:$0xff]
        %v400 = vld [vmem:[%s213 + $0x448] sm:$0xff]
        %v401 = vld [vmem:[%s213 + $0x450] sm:$0xff]
        %v402 = vld [vmem:[%s213 + $0x458] sm:$0xff]
        %v403 = vld [vmem:[%s213 + $0x460] sm:$0xff]
        %v404 = vld [vmem:[%s213 + $0x468] sm:$0xff]
        %v405 = vld [vmem:[%s213 + $0x470] sm:$0xff]
        %v406 = vld [vmem:[%s213 + $0x478] sm:$0xff]
        %v407 = vld [vmem:[%s213 + $0x480] sm:$0xff]
        %v408 = vld [vmem:[%s213 + $0x488] sm:$0xff]
        %v409 = vld [vmem:[%s213 + $0x490] sm:$0xff]
        %v410 = vld [vmem:[%s213 + $0x498] sm:$0xff]
        %v411 = vld [vmem:[%s213 + $0x4a0] sm:$0xff]
        %v412 = vld [vmem:[%s213 + $0x4a8] sm:$0xff]
        %v413 = vld [vmem:[%s213 + $0x4b0] sm:$0xff]
        %v414 = vld [vmem:[%s213 + $0x4b8] sm:$0xff]
        %v415 = vld [vmem:[%s213 + $0x4c0] sm:$0xff]
        %v416 = vld [vmem:[%s213 + $0x4c8] sm:$0xff]
        %v417 = vld [vmem:[%s213 + $0x4d0] sm:$0xff]
        %v418 = vld [vmem:[%s213 + $0x4d8] sm:$0xff]
        %v419 = vld [vmem:[%s213 + $0x4e0] sm:$0xff]
        %v420 = vld [vmem:[%s213 + $0x4e8] sm:$0xff]
        %v421 = vld [vmem:[%s213 + $0x4f0] sm:$0xff]
        %v422 = vld [vmem:[%s213 + $0x4f8] sm:$0xff]
        %v423 = vld [vmem:[%s213 + $0x500] sm:$0xff]
        %v424 = vld [vmem:[%s213 + $0x508] sm:$0xff]
        %v425 = vld [vmem:[%s213 + $0x510] sm:$0xff]
        %v426 = vld [vmem:[%s213 + $0x518] sm:$0xff]
        %v427 = vld [vmem:[%s213 + $0x520] sm:$0xff]
        %v428 = vld [vmem:[%s213 + $0x528] sm:$0xff]
        %v429 = vld [vmem:[%s213 + $0x530] sm:$0xff]
        %v430 = vld [vmem:[%s213 + $0x538] sm:$0xff]
        %v431 = vld [vmem:[%s213 + $0x540] sm:$0xff]
        %v432 = vld [vmem:[%s213 + $0x548] sm:$0xff]
        %v433 = vld [vmem:[%s213 + $0x550] sm:$0xff]
        %v434 = vld [vmem:[%s213 + $0x558] sm:$0xff]
        %v435 = vld [vmem:[%s213 + $0x560] sm:$0xff]
        %v436 = vld [vmem:[%s213 + $0x568] sm:$0xff]
        %v437 = vld [vmem:[%s213 + $0x570] sm:$0xff]
        %v438 = vld [vmem:[%s213 + $0x578] sm:$0xff]
        %v439 = vld [vmem:[%s213 + $0x580] sm:$0xff]
        %v440 = vld [vmem:[%s213 + $0x588] sm:$0xff]
        %v441 = vld [vmem:[%s213 + $0x590] sm:$0xff]
        %v442 = vld [vmem:[%s213 + $0x598] sm:$0xff]
        %v443 = vld [vmem:[%s213 + $0x5a0] sm:$0xff]
        %v444 = vld [vmem:[%s213 + $0x5a8] sm:$0xff]
        %v445 = vld [vmem:[%s213 + $0x5b0] sm:$0xff]
        %v446 = vld [vmem:[%s213 + $0x5b8] sm:$0xff]
        %v447 = vld [vmem:[%s213 + $0x5c0] sm:$0xff]
        %v448 = vld [vmem:[%s213 + $0x5c8] sm:$0xff]
        %v449 = vld [vmem:[%s213 + $0x5d0] sm:$0xff]
        %v450 = vld [vmem:[%s213 + $0x5d8] sm:$0xff]
        %v451 = vld [vmem:[%s213 + $0x5e0] sm:$0xff]
        %v452 = vld [vmem:[%s213 + $0x5e8] sm:$0xff]
        %v453 = vld [vmem:[%s213 + $0x5f0] sm:$0xff]
        %v454 = vld [vmem:[%s213 + $0x5f8] sm:$0xff]
        %v455 = vld [vmem:[%s213 + $0x600] sm:$0xff]
        %v456 = vld [vmem:[%s213 + $0x608] sm:$0xff]
        %v457 = vld [vmem:[%s213 + $0x610] sm:$0xff]
        %v458 = vld [vmem:[%s213 + $0x618] sm:$0xff]
        %v459 = vld [vmem:[%s213 + $0x620] sm:$0xff]
        %v460 = vld [vmem:[%s213 + $0x628] sm:$0xff]
        %v461 = vld [vmem:[%s213 + $0x630] sm:$0xff]
        %v462 = vld [vmem:[%s213 + $0x638] sm:$0xff]
        %v463 = vld [vmem:[%s213 + $0x640] sm:$0xff]
        %v464 = vld [vmem:[%s213 + $0x648] sm:$0xff]
        %v465 = vld [vmem:[%s213 + $0x650] sm:$0xff]
        %v466 = vld [vmem:[%s213 + $0x658] sm:$0xff]
        %v467 = vld [vmem:[%s213 + $0x660] sm:$0xff]
        %v468 = vld [vmem:[%s213 + $0x668] sm:$0xff]
        %v469 = vld [vmem:[%s213 + $0x670] sm:$0xff]
        %v470 = vld [vmem:[%s213 + $0x678] sm:$0xff]
        %v471 = vld [vmem:[%s213 + $0x680] sm:$0xff]
        %v472 = vld [vmem:[%s213 + $0x688] sm:$0xff]
        %v473 = vld [vmem:[%s213 + $0x690] sm:$0xff]
        %v474 = vld [vmem:[%s213 + $0x698] sm:$0xff]
        %v475 = vld [vmem:[%s213 + $0x6a0] sm:$0xff]
        %v476 = vld [vmem:[%s213 + $0x6a8] sm:$0xff]
        %v477 = vld [vmem:[%s213 + $0x6b0] sm:$0xff]
        %v478 = vld [vmem:[%s213 + $0x6b8] sm:$0xff]
        %v479 = vld [vmem:[%s213 + $0x6c0] sm:$0xff]
        %v480 = vld [vmem:[%s213 + $0x6c8] sm:$0xff]
        %v481 = vld [vmem:[%s213 + $0x6d0] sm:$0xff]
        %v482 = vld [vmem:[%s213 + $0x6d8] sm:$0xff]
        %v483 = vld [vmem:[%s213 + $0x6e0] sm:$0xff]
        %v484 = vld [vmem:[%s213 + $0x6e8] sm:$0xff]
        %v485 = vld [vmem:[%s213 + $0x6f0] sm:$0xff]
        %v486 = vld [vmem:[%s213 + $0x6f8] sm:$0xff]
        %v487 = vld [vmem:[%s213 + $0x700] sm:$0xff]
        %v488 = vld [vmem:[%s213 + $0x708] sm:$0xff]
        %v489 = vld [vmem:[%s213 + $0x710] sm:$0xff]
        %v490 = vld [vmem:[%s213 + $0x718] sm:$0xff]
        %v491 = vld [vmem:[%s213 + $0x720] sm:$0xff]
        %v492 = vld [vmem:[%s213 + $0x728] sm:$0xff]
        %v493 = vld [vmem:[%s213 + $0x730] sm:$0xff]
        %v494 = vld [vmem:[%s213 + $0x738] sm:$0xff]
        %v495 = vld [vmem:[%s213 + $0x740] sm:$0xff]
        %v496 = vld [vmem:[%s213 + $0x748] sm:$0xff]
        %v497 = vld [vmem:[%s213 + $0x750] sm:$0xff]
        %v498 = vld [vmem:[%s213 + $0x758] sm:$0xff]
        %v499 = vld [vmem:[%s213 + $0x760] sm:$0xff]
        %v500 = vld [vmem:[%s213 + $0x768] sm:$0xff]
        %v501 = vld [vmem:[%s213 + $0x770] sm:$0xff]
        %v502 = vld [vmem:[%s213 + $0x778] sm:$0xff]
        %v503 = vld [vmem:[%s213 + $0x780] sm:$0xff]
        %v504 = vld [vmem:[%s213 + $0x788] sm:$0xff]
        %v505 = vld [vmem:[%s213 + $0x790] sm:$0xff]
        %v506 = vld [vmem:[%s213 + $0x798] sm:$0xff]
        %v507 = vld [vmem:[%s213 + $0x7a0] sm:$0xff]
        %v508 = vld [vmem:[%s213 + $0x7a8] sm:$0xff]
        %v509 = vld [vmem:[%s213 + $0x7b0] sm:$0xff]
        %v510 = vld [vmem:[%s213 + $0x7b8] sm:$0xff]
        %v511 = vld [vmem:[%s213 + $0x7c0] sm:$0xff]
        %v512 = vld [vmem:[%s213 + $0x7c8] sm:$0xff]
        %v513 = vld [vmem:[%s213 + $0x7d0] sm:$0xff]
        %v514 = vld [vmem:[%s213 + $0x7d8] sm:$0xff]
        %v515 = vld [vmem:[%s213 + $0x7e0] sm:$0xff]
        %v516 = vld [vmem:[%s213 + $0x7e8] sm:$0xff]
        %v517 = vld [vmem:[%s213 + $0x7f0] sm:$0xff]
        %v518 = vld [vmem:[%s213 + $0x7f8] sm:$0xff]
        %v520 = vcombine.high %v262, %v262
        %v522 = vunpack.c.l.s4 1966171168
        %v523 = vunpack.c.0.s8 %v522
        %v524 = vlaneseq
        %v525 = vshrl.u32 %v524, 7
        %v526 = vsub.s32 %v523, %v525
        %v527 = vrot.slane %v262, %v526
        %v529 = vunpack.c.l.s4 1966171168
        %v530 = vunpack.c.0.s8 %v529
        %v531 = vlaneseq
        %v532 = vshrl.u32 %v531, 7
        %v533 = vsub.s32 %v530, %v532
        %v534 = vrot.slane %v520, %v533
        %v535 = vcombine.high %v527, %v527
        %v536 = vcombine.high %v534, %v534
        %v538 = vunpack.c.l.s4 1966171168
        %v539 = vunpack.c.0.s8 %v538
        %v540 = vlaneseq
        %v541 = vshrl.u32 %v540, 7
        %v542 = vsub.s32 %v539, %v541
        %v543 = vrot.slane %v527, %v542
        %v545 = vunpack.c.l.s4 1966171168
        %v546 = vunpack.c.0.s8 %v545
        %v547 = vlaneseq
        %v548 = vshrl.u32 %v547, 7
        %v549 = vsub.s32 %v546, %v548
        %v550 = vrot.slane %v534, %v549
        %v552 = vunpack.c.l.s4 1966171168
        %v553 = vunpack.c.0.s8 %v552
        %v554 = vlaneseq
        %v555 = vshrl.u32 %v554, 7
        %v556 = vsub.s32 %v553, %v555
        %v557 = vrot.slane %v535, %v556
        %v559 = vunpack.c.l.s4 1966171168
        %v560 = vunpack.c.0.s8 %v559
        %v561 = vlaneseq
        %v562 = vshrl.u32 %v561, 7
        %v563 = vsub.s32 %v560, %v562
        %v564 = vrot.slane %v536, %v563
        %v565 = vcombine.high %v543, %v543
        %v566 = vcombine.high %v550, %v550
        %v567 = vcombine.high %v557, %v557
        %v568 = vcombine.high %v564, %v564
        %v833 = vunpack.c.l.b16 %v263
        %v834 = vunpack.c.h.b16 %v263
        %v835 = vunpack.c.l.b16 %v264
        %v836 = vunpack.c.h.b16 %v264
        %v837 = vunpack.c.l.b16 %v265
        %v838 = vunpack.c.h.b16 %v265
        %v839 = vunpack.c.l.b16 %v266
        %v840 = vunpack.c.h.b16 %v266
        %v841 = vunpack.c.l.b16 %v267
        %v842 = vunpack.c.h.b16 %v267
        %v843 = vunpack.c.l.b16 %v268
        %v844 = vunpack.c.h.b16 %v268
        %v845 = vunpack.c.l.b16 %v269
        %v846 = vunpack.c.h.b16 %v269
        %v847 = vunpack.c.l.b16 %v270
        %v848 = vunpack.c.h.b16 %v270
        %v849 = vunpack.c.l.b16 %v271
        %v850 = vunpack.c.h.b16 %v271
        %v851 = vunpack.c.l.b16 %v272
        %v852 = vunpack.c.h.b16 %v272
        %v853 = vunpack.c.l.b16 %v273
        %v854 = vunpack.c.h.b16 %v273
        %v855 = vunpack.c.l.b16 %v274
        %v856 = vunpack.c.h.b16 %v274
        %v857 = vunpack.c.l.b16 %v275
        %v858 = vunpack.c.h.b16 %v275
        %v859 = vunpack.c.l.b16 %v276
        %v860 = vunpack.c.h.b16 %v276
        %v861 = vunpack.c.l.b16 %v277
        %v862 = vunpack.c.h.b16 %v277
        %v863 = vunpack.c.l.b16 %v278
        %v864 = vunpack.c.h.b16 %v278
        %v865 = vunpack.c.l.b16 %v279
        %v866 = vunpack.c.h.b16 %v279
        %v867 = vunpack.c.l.b16 %v280
        %v868 = vunpack.c.h.b16 %v280
        %v869 = vunpack.c.l.b16 %v281
        %v870 = vunpack.c.h.b16 %v281
        %v871 = vunpack.c.l.b16 %v282
        %v872 = vunpack.c.h.b16 %v282
        %v873 = vunpack.c.l.b16 %v283
        %v874 = vunpack.c.h.b16 %v283
        %v875 = vunpack.c.l.b16 %v284
        %v876 = vunpack.c.h.b16 %v284
        %v877 = vunpack.c.l.b16 %v285
        %v878 = vunpack.c.h.b16 %v285
        %v879 = vunpack.c.l.b16 %v286
        %v880 = vunpack.c.h.b16 %v286
        %v881 = vunpack.c.l.b16 %v287
        %v882 = vunpack.c.h.b16 %v287
        %v883 = vunpack.c.l.b16 %v288
        %v884 = vunpack.c.h.b16 %v288
        %v885 = vunpack.c.l.b16 %v289
        %v886 = vunpack.c.h.b16 %v289
        %v887 = vunpack.c.l.b16 %v290
        %v888 = vunpack.c.h.b16 %v290
        %v889 = vunpack.c.l.b16 %v291
        %v890 = vunpack.c.h.b16 %v291
        %v891 = vunpack.c.l.b16 %v292
        %v892 = vunpack.c.h.b16 %v292
        %v893 = vunpack.c.l.b16 %v293
        %v894 = vunpack.c.h.b16 %v293
        %v895 = vunpack.c.l.b16 %v294
        %v896 = vunpack.c.h.b16 %v294
        %v897 = vunpack.c.l.b16 %v295
        %v898 = vunpack.c.h.b16 %v295
        %v899 = vunpack.c.l.b16 %v296
        %v900 = vunpack.c.h.b16 %v296
        %v901 = vunpack.c.l.b16 %v297
        %v902 = vunpack.c.h.b16 %v297
        %v903 = vunpack.c.l.b16 %v298
        %v904 = vunpack.c.h.b16 %v298
        %v905 = vunpack.c.l.b16 %v299
        %v906 = vunpack.c.h.b16 %v299
        %v907 = vunpack.c.l.b16 %v300
        %v908 = vunpack.c.h.b16 %v300
        %v909 = vunpack.c.l.b16 %v301
        %v910 = vunpack.c.h.b16 %v301
        %v911 = vunpack.c.l.b16 %v302
        %v912 = vunpack.c.h.b16 %v302
        %v913 = vunpack.c.l.b16 %v303
        %v914 = vunpack.c.h.b16 %v303
        %v915 = vunpack.c.l.b16 %v304
        %v916 = vunpack.c.h.b16 %v304
        %v917 = vunpack.c.l.b16 %v305
        %v918 = vunpack.c.h.b16 %v305
        %v919 = vunpack.c.l.b16 %v306
        %v920 = vunpack.c.h.b16 %v306
        %v921 = vunpack.c.l.b16 %v307
        %v922 = vunpack.c.h.b16 %v307
        %v923 = vunpack.c.l.b16 %v308
        %v924 = vunpack.c.h.b16 %v308
        %v925 = vunpack.c.l.b16 %v309
        %v926 = vunpack.c.h.b16 %v309
        %v927 = vunpack.c.l.b16 %v310
        %v928 = vunpack.c.h.b16 %v310
        %v929 = vunpack.c.l.b16 %v311
        %v930 = vunpack.c.h.b16 %v311
        %v931 = vunpack.c.l.b16 %v312
        %v932 = vunpack.c.h.b16 %v312
        %v933 = vunpack.c.l.b16 %v313
        %v934 = vunpack.c.h.b16 %v313
        %v935 = vunpack.c.l.b16 %v314
        %v936 = vunpack.c.h.b16 %v314
        %v937 = vunpack.c.l.b16 %v315
        %v938 = vunpack.c.h.b16 %v315
        %v939 = vunpack.c.l.b16 %v316
        %v940 = vunpack.c.h.b16 %v316
        %v941 = vunpack.c.l.b16 %v317
        %v942 = vunpack.c.h.b16 %v317
        %v943 = vunpack.c.l.b16 %v318
        %v944 = vunpack.c.h.b16 %v318
        %v945 = vunpack.c.l.b16 %v319
        %v946 = vunpack.c.h.b16 %v319
        %v947 = vunpack.c.l.b16 %v320
        %v948 = vunpack.c.h.b16 %v320
        %v949 = vunpack.c.l.b16 %v321
        %v950 = vunpack.c.h.b16 %v321
        %v951 = vunpack.c.l.b16 %v322
        %v952 = vunpack.c.h.b16 %v322
        %v953 = vunpack.c.l.b16 %v323
        %v954 = vunpack.c.h.b16 %v323
        %v955 = vunpack.c.l.b16 %v324
        %v956 = vunpack.c.h.b16 %v324
        %v957 = vunpack.c.l.b16 %v325
        %v958 = vunpack.c.h.b16 %v325
        %v959 = vunpack.c.l.b16 %v326
        %v960 = vunpack.c.h.b16 %v326
        %v961 = vunpack.c.l.b16 %v327
        %v962 = vunpack.c.h.b16 %v327
        %v963 = vunpack.c.l.b16 %v328
        %v964 = vunpack.c.h.b16 %v328
        %v965 = vunpack.c.l.b16 %v329
        %v966 = vunpack.c.h.b16 %v329
        %v967 = vunpack.c.l.b16 %v330
        %v968 = vunpack.c.h.b16 %v330
        %v969 = vunpack.c.l.b16 %v331
        %v970 = vunpack.c.h.b16 %v331
        %v971 = vunpack.c.l.b16 %v332
        %v972 = vunpack.c.h.b16 %v332
        %v973 = vunpack.c.l.b16 %v333
        %v974 = vunpack.c.h.b16 %v333
        %v975 = vunpack.c.l.b16 %v334
        %v976 = vunpack.c.h.b16 %v334
        %v977 = vunpack.c.l.b16 %v335
        %v978 = vunpack.c.h.b16 %v335
        %v979 = vunpack.c.l.b16 %v336
        %v980 = vunpack.c.h.b16 %v336
        %v981 = vunpack.c.l.b16 %v337
        %v982 = vunpack.c.h.b16 %v337
        %v983 = vunpack.c.l.b16 %v338
        %v984 = vunpack.c.h.b16 %v338
        %v985 = vunpack.c.l.b16 %v339
        %v986 = vunpack.c.h.b16 %v339
        %v987 = vunpack.c.l.b16 %v340
        %v988 = vunpack.c.h.b16 %v340
        %v989 = vunpack.c.l.b16 %v341
        %v990 = vunpack.c.h.b16 %v341
        %v991 = vunpack.c.l.b16 %v342
        %v992 = vunpack.c.h.b16 %v342
        %v993 = vunpack.c.l.b16 %v343
        %v994 = vunpack.c.h.b16 %v343
        %v995 = vunpack.c.l.b16 %v344
        %v996 = vunpack.c.h.b16 %v344
        %v997 = vunpack.c.l.b16 %v345
        %v998 = vunpack.c.h.b16 %v345
        %v999 = vunpack.c.l.b16 %v346
        %v1000 = vunpack.c.h.b16 %v346
        %v1001 = vunpack.c.l.b16 %v347
        %v1002 = vunpack.c.h.b16 %v347
        %v1003 = vunpack.c.l.b16 %v348
        %v1004 = vunpack.c.h.b16 %v348
        %v1005 = vunpack.c.l.b16 %v349
        %v1006 = vunpack.c.h.b16 %v349
        %v1007 = vunpack.c.l.b16 %v350
        %v1008 = vunpack.c.h.b16 %v350
        %v1009 = vunpack.c.l.b16 %v351
        %v1010 = vunpack.c.h.b16 %v351
        %v1011 = vunpack.c.l.b16 %v352
        %v1012 = vunpack.c.h.b16 %v352
        %v1013 = vunpack.c.l.b16 %v353
        %v1014 = vunpack.c.h.b16 %v353
        %v1015 = vunpack.c.l.b16 %v354
        %v1016 = vunpack.c.h.b16 %v354
        %v1017 = vunpack.c.l.b16 %v355
        %v1018 = vunpack.c.h.b16 %v355
        %v1019 = vunpack.c.l.b16 %v356
        %v1020 = vunpack.c.h.b16 %v356
        %v1021 = vunpack.c.l.b16 %v357
        %v1022 = vunpack.c.h.b16 %v357
        %v1023 = vunpack.c.l.b16 %v358
        %v1024 = vunpack.c.h.b16 %v358
        %v1025 = vunpack.c.l.b16 %v359
        %v1026 = vunpack.c.h.b16 %v359
        %v1027 = vunpack.c.l.b16 %v360
        %v1028 = vunpack.c.h.b16 %v360
        %v1029 = vunpack.c.l.b16 %v361
        %v1030 = vunpack.c.h.b16 %v361
        %v1031 = vunpack.c.l.b16 %v362
        %v1032 = vunpack.c.h.b16 %v362
        %v1033 = vunpack.c.l.b16 %v363
        %v1034 = vunpack.c.h.b16 %v363
        %v1035 = vunpack.c.l.b16 %v364
        %v1036 = vunpack.c.h.b16 %v364
        %v1037 = vunpack.c.l.b16 %v365
        %v1038 = vunpack.c.h.b16 %v365
        %v1039 = vunpack.c.l.b16 %v366
        %v1040 = vunpack.c.h.b16 %v366
        %v1041 = vunpack.c.l.b16 %v367
        %v1042 = vunpack.c.h.b16 %v367
        %v1043 = vunpack.c.l.b16 %v368
        %v1044 = vunpack.c.h.b16 %v368
        %v1045 = vunpack.c.l.b16 %v369
        %v1046 = vunpack.c.h.b16 %v369
        %v1047 = vunpack.c.l.b16 %v370
        %v1048 = vunpack.c.h.b16 %v370
        %v1049 = vunpack.c.l.b16 %v371
        %v1050 = vunpack.c.h.b16 %v371
        %v1051 = vunpack.c.l.b16 %v372
        %v1052 = vunpack.c.h.b16 %v372
        %v1053 = vunpack.c.l.b16 %v373
        %v1054 = vunpack.c.h.b16 %v373
        %v1055 = vunpack.c.l.b16 %v374
        %v1056 = vunpack.c.h.b16 %v374
        %v1057 = vunpack.c.l.b16 %v375
        %v1058 = vunpack.c.h.b16 %v375
        %v1059 = vunpack.c.l.b16 %v376
        %v1060 = vunpack.c.h.b16 %v376
        %v1061 = vunpack.c.l.b16 %v377
        %v1062 = vunpack.c.h.b16 %v377
        %v1063 = vunpack.c.l.b16 %v378
        %v1064 = vunpack.c.h.b16 %v378
        %v1065 = vunpack.c.l.b16 %v379
        %v1066 = vunpack.c.h.b16 %v379
        %v1067 = vunpack.c.l.b16 %v380
        %v1068 = vunpack.c.h.b16 %v380
        %v1069 = vunpack.c.l.b16 %v381
        %v1070 = vunpack.c.h.b16 %v381
        %v1071 = vunpack.c.l.b16 %v382
        %v1072 = vunpack.c.h.b16 %v382
        %v1073 = vunpack.c.l.b16 %v383
        %v1074 = vunpack.c.h.b16 %v383
        %v1075 = vunpack.c.l.b16 %v384
        %v1076 = vunpack.c.h.b16 %v384
        %v1077 = vunpack.c.l.b16 %v385
        %v1078 = vunpack.c.h.b16 %v385
        %v1079 = vunpack.c.l.b16 %v386
        %v1080 = vunpack.c.h.b16 %v386
        %v1081 = vunpack.c.l.b16 %v387
        %v1082 = vunpack.c.h.b16 %v387
        %v1083 = vunpack.c.l.b16 %v388
        %v1084 = vunpack.c.h.b16 %v388
        %v1085 = vunpack.c.l.b16 %v389
        %v1086 = vunpack.c.h.b16 %v389
        %v1087 = vunpack.c.l.b16 %v390
        %v1088 = vunpack.c.h.b16 %v390
        %v1089 = vunpack.c.l.b16 %v391
        %v1090 = vunpack.c.h.b16 %v391
        %v1091 = vunpack.c.l.b16 %v392
        %v1092 = vunpack.c.h.b16 %v392
        %v1093 = vunpack.c.l.b16 %v393
        %v1094 = vunpack.c.h.b16 %v393
        %v1095 = vunpack.c.l.b16 %v394
        %v1096 = vunpack.c.h.b16 %v394
        %v1097 = vunpack.c.l.b16 %v395
        %v1098 = vunpack.c.h.b16 %v395
        %v1099 = vunpack.c.l.b16 %v396
        %v1100 = vunpack.c.h.b16 %v396
        %v1101 = vunpack.c.l.b16 %v397
        %v1102 = vunpack.c.h.b16 %v397
        %v1103 = vunpack.c.l.b16 %v398
        %v1104 = vunpack.c.h.b16 %v398
        %v1105 = vunpack.c.l.b16 %v399
        %v1106 = vunpack.c.h.b16 %v399
        %v1107 = vunpack.c.l.b16 %v400
        %v1108 = vunpack.c.h.b16 %v400
        %v1109 = vunpack.c.l.b16 %v401
        %v1110 = vunpack.c.h.b16 %v401
        %v1111 = vunpack.c.l.b16 %v402
        %v1112 = vunpack.c.h.b16 %v402
        %v1113 = vunpack.c.l.b16 %v403
        %v1114 = vunpack.c.h.b16 %v403
        %v1115 = vunpack.c.l.b16 %v404
        %v1116 = vunpack.c.h.b16 %v404
        %v1117 = vunpack.c.l.b16 %v405
        %v1118 = vunpack.c.h.b16 %v405
        %v1119 = vunpack.c.l.b16 %v406
        %v1120 = vunpack.c.h.b16 %v406
        %v1121 = vunpack.c.l.b16 %v407
        %v1122 = vunpack.c.h.b16 %v407
        %v1123 = vunpack.c.l.b16 %v408
        %v1124 = vunpack.c.h.b16 %v408
        %v1125 = vunpack.c.l.b16 %v409
        %v1126 = vunpack.c.h.b16 %v409
        %v1127 = vunpack.c.l.b16 %v410
        %v1128 = vunpack.c.h.b16 %v410
        %v1129 = vunpack.c.l.b16 %v411
        %v1130 = vunpack.c.h.b16 %v411
        %v1131 = vunpack.c.l.b16 %v412
        %v1132 = vunpack.c.h.b16 %v412
        %v1133 = vunpack.c.l.b16 %v413
        %v1134 = vunpack.c.h.b16 %v413
        %v1135 = vunpack.c.l.b16 %v414
        %v1136 = vunpack.c.h.b16 %v414
        %v1137 = vunpack.c.l.b16 %v415
        %v1138 = vunpack.c.h.b16 %v415
        %v1139 = vunpack.c.l.b16 %v416
        %v1140 = vunpack.c.h.b16 %v416
        %v1141 = vunpack.c.l.b16 %v417
        %v1142 = vunpack.c.h.b16 %v417
        %v1143 = vunpack.c.l.b16 %v418
        %v1144 = vunpack.c.h.b16 %v418
        %v1145 = vunpack.c.l.b16 %v419
        %v1146 = vunpack.c.h.b16 %v419
        %v1147 = vunpack.c.l.b16 %v420
        %v1148 = vunpack.c.h.b16 %v420
        %v1149 = vunpack.c.l.b16 %v421
        %v1150 = vunpack.c.h.b16 %v421
        %v1151 = vunpack.c.l.b16 %v422
        %v1152 = vunpack.c.h.b16 %v422
        %v1153 = vunpack.c.l.b16 %v423
        %v1154 = vunpack.c.h.b16 %v423
        %v1155 = vunpack.c.l.b16 %v424
        %v1156 = vunpack.c.h.b16 %v424
        %v1157 = vunpack.c.l.b16 %v425
        %v1158 = vunpack.c.h.b16 %v425
        %v1159 = vunpack.c.l.b16 %v426
        %v1160 = vunpack.c.h.b16 %v426
        %v1161 = vunpack.c.l.b16 %v427
        %v1162 = vunpack.c.h.b16 %v427
        %v1163 = vunpack.c.l.b16 %v428
        %v1164 = vunpack.c.h.b16 %v428
        %v1165 = vunpack.c.l.b16 %v429
        %v1166 = vunpack.c.h.b16 %v429
        %v1167 = vunpack.c.l.b16 %v430
        %v1168 = vunpack.c.h.b16 %v430
        %v1169 = vunpack.c.l.b16 %v431
        %v1170 = vunpack.c.h.b16 %v431
        %v1171 = vunpack.c.l.b16 %v432
        %v1172 = vunpack.c.h.b16 %v432
        %v1173 = vunpack.c.l.b16 %v433
        %v1174 = vunpack.c.h.b16 %v433
        %v1175 = vunpack.c.l.b16 %v434
        %v1176 = vunpack.c.h.b16 %v434
        %v1177 = vunpack.c.l.b16 %v435
        %v1178 = vunpack.c.h.b16 %v435
        %v1179 = vunpack.c.l.b16 %v436
        %v1180 = vunpack.c.h.b16 %v436
        %v1181 = vunpack.c.l.b16 %v437
        %v1182 = vunpack.c.h.b16 %v437
        %v1183 = vunpack.c.l.b16 %v438
        %v1184 = vunpack.c.h.b16 %v438
        %v1185 = vunpack.c.l.b16 %v439
        %v1186 = vunpack.c.h.b16 %v439
        %v1187 = vunpack.c.l.b16 %v440
        %v1188 = vunpack.c.h.b16 %v440
        %v1189 = vunpack.c.l.b16 %v441
        %v1190 = vunpack.c.h.b16 %v441
        %v1191 = vunpack.c.l.b16 %v442
        %v1192 = vunpack.c.h.b16 %v442
        %v1193 = vunpack.c.l.b16 %v443
        %v1194 = vunpack.c.h.b16 %v443
        %v1195 = vunpack.c.l.b16 %v444
        %v1196 = vunpack.c.h.b16 %v444
        %v1197 = vunpack.c.l.b16 %v445
        %v1198 = vunpack.c.h.b16 %v445
        %v1199 = vunpack.c.l.b16 %v446
        %v1200 = vunpack.c.h.b16 %v446
        %v1201 = vunpack.c.l.b16 %v447
        %v1202 = vunpack.c.h.b16 %v447
        %v1203 = vunpack.c.l.b16 %v448
        %v1204 = vunpack.c.h.b16 %v448
        %v1205 = vunpack.c.l.b16 %v449
        %v1206 = vunpack.c.h.b16 %v449
        %v1207 = vunpack.c.l.b16 %v450
        %v1208 = vunpack.c.h.b16 %v450
        %v1209 = vunpack.c.l.b16 %v451
        %v1210 = vunpack.c.h.b16 %v451
        %v1211 = vunpack.c.l.b16 %v452
        %v1212 = vunpack.c.h.b16 %v452
        %v1213 = vunpack.c.l.b16 %v453
        %v1214 = vunpack.c.h.b16 %v453
        %v1215 = vunpack.c.l.b16 %v454
        %v1216 = vunpack.c.h.b16 %v454
        %v1217 = vunpack.c.l.b16 %v455
        %v1218 = vunpack.c.h.b16 %v455
        %v1219 = vunpack.c.l.b16 %v456
        %v1220 = vunpack.c.h.b16 %v456
        %v1221 = vunpack.c.l.b16 %v457
        %v1222 = vunpack.c.h.b16 %v457
        %v1223 = vunpack.c.l.b16 %v458
        %v1224 = vunpack.c.h.b16 %v458
        %v1225 = vunpack.c.l.b16 %v459
        %v1226 = vunpack.c.h.b16 %v459
        %v1227 = vunpack.c.l.b16 %v460
        %v1228 = vunpack.c.h.b16 %v460
        %v1229 = vunpack.c.l.b16 %v461
        %v1230 = vunpack.c.h.b16 %v461
        %v1231 = vunpack.c.l.b16 %v462
        %v1232 = vunpack.c.h.b16 %v462
        %v1233 = vunpack.c.l.b16 %v463
        %v1234 = vunpack.c.h.b16 %v463
        %v1235 = vunpack.c.l.b16 %v464
        %v1236 = vunpack.c.h.b16 %v464
        %v1237 = vunpack.c.l.b16 %v465
        %v1238 = vunpack.c.h.b16 %v465
        %v1239 = vunpack.c.l.b16 %v466
        %v1240 = vunpack.c.h.b16 %v466
        %v1241 = vunpack.c.l.b16 %v467
        %v1242 = vunpack.c.h.b16 %v467
        %v1243 = vunpack.c.l.b16 %v468
        %v1244 = vunpack.c.h.b16 %v468
        %v1245 = vunpack.c.l.b16 %v469
        %v1246 = vunpack.c.h.b16 %v469
        %v1247 = vunpack.c.l.b16 %v470
        %v1248 = vunpack.c.h.b16 %v470
        %v1249 = vunpack.c.l.b16 %v471
        %v1250 = vunpack.c.h.b16 %v471
        %v1251 = vunpack.c.l.b16 %v472
        %v1252 = vunpack.c.h.b16 %v472
        %v1253 = vunpack.c.l.b16 %v473
        %v1254 = vunpack.c.h.b16 %v473
        %v1255 = vunpack.c.l.b16 %v474
        %v1256 = vunpack.c.h.b16 %v474
        %v1257 = vunpack.c.l.b16 %v475
        %v1258 = vunpack.c.h.b16 %v475
        %v1259 = vunpack.c.l.b16 %v476
        %v1260 = vunpack.c.h.b16 %v476
        %v1261 = vunpack.c.l.b16 %v477
        %v1262 = vunpack.c.h.b16 %v477
        %v1263 = vunpack.c.l.b16 %v478
        %v1264 = vunpack.c.h.b16 %v478
        %v1265 = vunpack.c.l.b16 %v479
        %v1266 = vunpack.c.h.b16 %v479
        %v1267 = vunpack.c.l.b16 %v480
        %v1268 = vunpack.c.h.b16 %v480
        %v1269 = vunpack.c.l.b16 %v481
        %v1270 = vunpack.c.h.b16 %v481
        %v1271 = vunpack.c.l.b16 %v482
        %v1272 = vunpack.c.h.b16 %v482
        %v1273 = vunpack.c.l.b16 %v483
        %v1274 = vunpack.c.h.b16 %v483
        %v1275 = vunpack.c.l.b16 %v484
        %v1276 = vunpack.c.h.b16 %v484
        %v1277 = vunpack.c.l.b16 %v485
        %v1278 = vunpack.c.h.b16 %v485
        %v1279 = vunpack.c.l.b16 %v486
        %v1280 = vunpack.c.h.b16 %v486
        %v1281 = vunpack.c.l.b16 %v487
        %v1282 = vunpack.c.h.b16 %v487
        %v1283 = vunpack.c.l.b16 %v488
        %v1284 = vunpack.c.h.b16 %v488
        %v1285 = vunpack.c.l.b16 %v489
        %v1286 = vunpack.c.h.b16 %v489
        %v1287 = vunpack.c.l.b16 %v490
        %v1288 = vunpack.c.h.b16 %v490
        %v1289 = vunpack.c.l.b16 %v491
        %v1290 = vunpack.c.h.b16 %v491
        %v1291 = vunpack.c.l.b16 %v492
        %v1292 = vunpack.c.h.b16 %v492
        %v1293 = vunpack.c.l.b16 %v493
        %v1294 = vunpack.c.h.b16 %v493
        %v1295 = vunpack.c.l.b16 %v494
        %v1296 = vunpack.c.h.b16 %v494
        %v1297 = vunpack.c.l.b16 %v495
        %v1298 = vunpack.c.h.b16 %v495
        %v1299 = vunpack.c.l.b16 %v496
        %v1300 = vunpack.c.h.b16 %v496
        %v1301 = vunpack.c.l.b16 %v497
        %v1302 = vunpack.c.h.b16 %v497
        %v1303 = vunpack.c.l.b16 %v498
        %v1304 = vunpack.c.h.b16 %v498
        %v1305 = vunpack.c.l.b16 %v499
        %v1306 = vunpack.c.h.b16 %v499
        %v1307 = vunpack.c.l.b16 %v500
        %v1308 = vunpack.c.h.b16 %v500
        %v1309 = vunpack.c.l.b16 %v501
        %v1310 = vunpack.c.h.b16 %v501
        %v1311 = vunpack.c.l.b16 %v502
        %v1312 = vunpack.c.h.b16 %v502
        %v1313 = vunpack.c.l.b16 %v503
        %v1314 = vunpack.c.h.b16 %v503
        %v1315 = vunpack.c.l.b16 %v504
        %v1316 = vunpack.c.h.b16 %v504
        %v1317 = vunpack.c.l.b16 %v505
        %v1318 = vunpack.c.h.b16 %v505
        %v1319 = vunpack.c.l.b16 %v506
        %v1320 = vunpack.c.h.b16 %v506
        %v1321 = vunpack.c.l.b16 %v507
        %v1322 = vunpack.c.h.b16 %v507
        %v1323 = vunpack.c.l.b16 %v508
        %v1324 = vunpack.c.h.b16 %v508
        %v1325 = vunpack.c.l.b16 %v509
        %v1326 = vunpack.c.h.b16 %v509
        %v1327 = vunpack.c.l.b16 %v510
        %v1328 = vunpack.c.h.b16 %v510
        %v1329 = vunpack.c.l.b16 %v511
        %v1330 = vunpack.c.h.b16 %v511
        %v1331 = vunpack.c.l.b16 %v512
        %v1332 = vunpack.c.h.b16 %v512
        %v1333 = vunpack.c.l.b16 %v513
        %v1334 = vunpack.c.h.b16 %v513
        %v1335 = vunpack.c.l.b16 %v514
        %v1336 = vunpack.c.h.b16 %v514
        %v1337 = vunpack.c.l.b16 %v515
        %v1338 = vunpack.c.h.b16 %v515
        %v1339 = vunpack.c.l.b16 %v516
        %v1340 = vunpack.c.h.b16 %v516
        %v1341 = vunpack.c.l.b16 %v517
        %v1342 = vunpack.c.h.b16 %v517
        %v1343 = vunpack.c.l.b16 %v518
        %v1344 = vunpack.c.h.b16 %v518
        %v1345 = vpack.c.b16 %v837, %v833
        %v1346 = vpack.c.b16 %v838, %v834
        %v1347 = vpack.c.b16 %v839, %v835
        %v1348 = vpack.c.b16 %v840, %v836
        %v1349 = vpack.c.b16 %v845, %v841
        %v1350 = vpack.c.b16 %v846, %v842
        %v1351 = vpack.c.b16 %v847, %v843
        %v1352 = vpack.c.b16 %v848, %v844
        %v1353 = vpack.c.b16 %v853, %v849
        %v1354 = vpack.c.b16 %v854, %v850
        %v1355 = vpack.c.b16 %v855, %v851
        %v1356 = vpack.c.b16 %v856, %v852
        %v1357 = vpack.c.b16 %v861, %v857
        %v1358 = vpack.c.b16 %v862, %v858
        %v1359 = vpack.c.b16 %v863, %v859
        %v1360 = vpack.c.b16 %v864, %v860
        %v1361 = vpack.c.b16 %v869, %v865
        %v1362 = vpack.c.b16 %v870, %v866
        %v1363 = vpack.c.b16 %v871, %v867
        %v1364 = vpack.c.b16 %v872, %v868
        %v1365 = vpack.c.b16 %v877, %v873
        %v1366 = vpack.c.b16 %v878, %v874
        %v1367 = vpack.c.b16 %v879, %v875
        %v1368 = vpack.c.b16 %v880, %v876
        %v1369 = vpack.c.b16 %v885, %v881
        %v1370 = vpack.c.b16 %v886, %v882
        %v1371 = vpack.c.b16 %v887, %v883
        %v1372 = vpack.c.b16 %v888, %v884
        %v1373 = vpack.c.b16 %v893, %v889
        %v1374 = vpack.c.b16 %v894, %v890
        %v1375 = vpack.c.b16 %v895, %v891
        %v1376 = vpack.c.b16 %v896, %v892
        %v1377 = vpack.c.b16 %v901, %v897
        %v1378 = vpack.c.b16 %v902, %v898
        %v1379 = vpack.c.b16 %v903, %v899
        %v1380 = vpack.c.b16 %v904, %v900
        %v1381 = vpack.c.b16 %v909, %v905
        %v1382 = vpack.c.b16 %v910, %v906
        %v1383 = vpack.c.b16 %v911, %v907
        %v1384 = vpack.c.b16 %v912, %v908
        %v1385 = vpack.c.b16 %v917, %v913
        %v1386 = vpack.c.b16 %v918, %v914
        %v1387 = vpack.c.b16 %v919, %v915
        %v1388 = vpack.c.b16 %v920, %v916
        %v1389 = vpack.c.b16 %v925, %v921
        %v1390 = vpack.c.b16 %v926, %v922
        %v1391 = vpack.c.b16 %v927, %v923
        %v1392 = vpack.c.b16 %v928, %v924
        %v1393 = vpack.c.b16 %v933, %v929
        %v1394 = vpack.c.b16 %v934, %v930
        %v1395 = vpack.c.b16 %v935, %v931
        %v1396 = vpack.c.b16 %v936, %v932
        %v1397 = vpack.c.b16 %v941, %v937
        %v1398 = vpack.c.b16 %v942, %v938
        %v1399 = vpack.c.b16 %v943, %v939
        %v1400 = vpack.c.b16 %v944, %v940
        %v1401 = vpack.c.b16 %v949, %v945
        %v1402 = vpack.c.b16 %v950, %v946
        %v1403 = vpack.c.b16 %v951, %v947
        %v1404 = vpack.c.b16 %v952, %v948
        %v1405 = vpack.c.b16 %v957, %v953
        %v1406 = vpack.c.b16 %v958, %v954
        %v1407 = vpack.c.b16 %v959, %v955
        %v1408 = vpack.c.b16 %v960, %v956
        %v1409 = vpack.c.b16 %v965, %v961
        %v1410 = vpack.c.b16 %v966, %v962
        %v1411 = vpack.c.b16 %v967, %v963
        %v1412 = vpack.c.b16 %v968, %v964
        %v1413 = vpack.c.b16 %v973, %v969
        %v1414 = vpack.c.b16 %v974, %v970
        %v1415 = vpack.c.b16 %v975, %v971
        %v1416 = vpack.c.b16 %v976, %v972
        %v1417 = vpack.c.b16 %v981, %v977
        %v1418 = vpack.c.b16 %v982, %v978
        %v1419 = vpack.c.b16 %v983, %v979
        %v1420 = vpack.c.b16 %v984, %v980
        %v1421 = vpack.c.b16 %v989, %v985
        %v1422 = vpack.c.b16 %v990, %v986
        %v1423 = vpack.c.b16 %v991, %v987
        %v1424 = vpack.c.b16 %v992, %v988
        %v1425 = vpack.c.b16 %v997, %v993
        %v1426 = vpack.c.b16 %v998, %v994
        %v1427 = vpack.c.b16 %v999, %v995
        %v1428 = vpack.c.b16 %v1000, %v996
        %v1429 = vpack.c.b16 %v1005, %v1001
        %v1430 = vpack.c.b16 %v1006, %v1002
        %v1431 = vpack.c.b16 %v1007, %v1003
        %v1432 = vpack.c.b16 %v1008, %v1004
        %v1433 = vpack.c.b16 %v1013, %v1009
        %v1434 = vpack.c.b16 %v1014, %v1010
        %v1435 = vpack.c.b16 %v1015, %v1011
        %v1436 = vpack.c.b16 %v1016, %v1012
        %v1437 = vpack.c.b16 %v1021, %v1017
        %v1438 = vpack.c.b16 %v1022, %v1018
        %v1439 = vpack.c.b16 %v1023, %v1019
        %v1440 = vpack.c.b16 %v1024, %v1020
        %v1441 = vpack.c.b16 %v1029, %v1025
        %v1442 = vpack.c.b16 %v1030, %v1026
        %v1443 = vpack.c.b16 %v1031, %v1027
        %v1444 = vpack.c.b16 %v1032, %v1028
        %v1445 = vpack.c.b16 %v1037, %v1033
        %v1446 = vpack.c.b16 %v1038, %v1034
        %v1447 = vpack.c.b16 %v1039, %v1035
        %v1448 = vpack.c.b16 %v1040, %v1036
        %v1449 = vpack.c.b16 %v1045, %v1041
        %v1450 = vpack.c.b16 %v1046, %v1042
        %v1451 = vpack.c.b16 %v1047, %v1043
        %v1452 = vpack.c.b16 %v1048, %v1044
        %v1453 = vpack.c.b16 %v1053, %v1049
        %v1454 = vpack.c.b16 %v1054, %v1050
        %v1455 = vpack.c.b16 %v1055, %v1051
        %v1456 = vpack.c.b16 %v1056, %v1052
        %v1457 = vpack.c.b16 %v1061, %v1057
        %v1458 = vpack.c.b16 %v1062, %v1058
        %v1459 = vpack.c.b16 %v1063, %v1059
        %v1460 = vpack.c.b16 %v1064, %v1060
        %v1461 = vpack.c.b16 %v1069, %v1065
        %v1462 = vpack.c.b16 %v1070, %v1066
        %v1463 = vpack.c.b16 %v1071, %v1067
        %v1464 = vpack.c.b16 %v1072, %v1068
        %v1465 = vpack.c.b16 %v1077, %v1073
        %v1466 = vpack.c.b16 %v1078, %v1074
        %v1467 = vpack.c.b16 %v1079, %v1075
        %v1468 = vpack.c.b16 %v1080, %v1076
        %v1469 = vpack.c.b16 %v1085, %v1081
        %v1470 = vpack.c.b16 %v1086, %v1082
        %v1471 = vpack.c.b16 %v1087, %v1083
        %v1472 = vpack.c.b16 %v1088, %v1084
        %v1473 = vpack.c.b16 %v1093, %v1089
        %v1474 = vpack.c.b16 %v1094, %v1090
        %v1475 = vpack.c.b16 %v1095, %v1091
        %v1476 = vpack.c.b16 %v1096, %v1092
        %v1477 = vpack.c.b16 %v1101, %v1097
        %v1478 = vpack.c.b16 %v1102, %v1098
        %v1479 = vpack.c.b16 %v1103, %v1099
        %v1480 = vpack.c.b16 %v1104, %v1100
        %v1481 = vpack.c.b16 %v1109, %v1105
        %v1482 = vpack.c.b16 %v1110, %v1106
        %v1483 = vpack.c.b16 %v1111, %v1107
        %v1484 = vpack.c.b16 %v1112, %v1108
        %v1485 = vpack.c.b16 %v1117, %v1113
        %v1486 = vpack.c.b16 %v1118, %v1114
        %v1487 = vpack.c.b16 %v1119, %v1115
        %v1488 = vpack.c.b16 %v1120, %v1116
        %v1489 = vpack.c.b16 %v1125, %v1121
        %v1490 = vpack.c.b16 %v1126, %v1122
        %v1491 = vpack.c.b16 %v1127, %v1123
        %v1492 = vpack.c.b16 %v1128, %v1124
        %v1493 = vpack.c.b16 %v1133, %v1129
        %v1494 = vpack.c.b16 %v1134, %v1130
        %v1495 = vpack.c.b16 %v1135, %v1131
        %v1496 = vpack.c.b16 %v1136, %v1132
        %v1497 = vpack.c.b16 %v1141, %v1137
        %v1498 = vpack.c.b16 %v1142, %v1138
        %v1499 = vpack.c.b16 %v1143, %v1139
        %v1500 = vpack.c.b16 %v1144, %v1140
        %v1501 = vpack.c.b16 %v1149, %v1145
        %v1502 = vpack.c.b16 %v1150, %v1146
        %v1503 = vpack.c.b16 %v1151, %v1147
        %v1504 = vpack.c.b16 %v1152, %v1148
        %v1505 = vpack.c.b16 %v1157, %v1153
        %v1506 = vpack.c.b16 %v1158, %v1154
        %v1507 = vpack.c.b16 %v1159, %v1155
        %v1508 = vpack.c.b16 %v1160, %v1156
        %v1509 = vpack.c.b16 %v1165, %v1161
        %v1510 = vpack.c.b16 %v1166, %v1162
        %v1511 = vpack.c.b16 %v1167, %v1163
        %v1512 = vpack.c.b16 %v1168, %v1164
        %v1513 = vpack.c.b16 %v1173, %v1169
        %v1514 = vpack.c.b16 %v1174, %v1170
        %v1515 = vpack.c.b16 %v1175, %v1171
        %v1516 = vpack.c.b16 %v1176, %v1172
        %v1517 = vpack.c.b16 %v1181, %v1177
        %v1518 = vpack.c.b16 %v1182, %v1178
        %v1519 = vpack.c.b16 %v1183, %v1179
        %v1520 = vpack.c.b16 %v1184, %v1180
        %v1521 = vpack.c.b16 %v1189, %v1185
        %v1522 = vpack.c.b16 %v1190, %v1186
        %v1523 = vpack.c.b16 %v1191, %v1187
        %v1524 = vpack.c.b16 %v1192, %v1188
        %v1525 = vpack.c.b16 %v1197, %v1193
        %v1526 = vpack.c.b16 %v1198, %v1194
        %v1527 = vpack.c.b16 %v1199, %v1195
        %v1528 = vpack.c.b16 %v1200, %v1196
        %v1529 = vpack.c.b16 %v1205, %v1201
        %v1530 = vpack.c.b16 %v1206, %v1202
        %v1531 = vpack.c.b16 %v1207, %v1203
        %v1532 = vpack.c.b16 %v1208, %v1204
        %v1533 = vpack.c.b16 %v1213, %v1209
        %v1534 = vpack.c.b16 %v1214, %v1210
        %v1535 = vpack.c.b16 %v1215, %v1211
        %v1536 = vpack.c.b16 %v1216, %v1212
        %v1537 = vpack.c.b16 %v1221, %v1217
        %v1538 = vpack.c.b16 %v1222, %v1218
        %v1539 = vpack.c.b16 %v1223, %v1219
        %v1540 = vpack.c.b16 %v1224, %v1220
        %v1541 = vpack.c.b16 %v1229, %v1225
        %v1542 = vpack.c.b16 %v1230, %v1226
        %v1543 = vpack.c.b16 %v1231, %v1227
        %v1544 = vpack.c.b16 %v1232, %v1228
        %v1545 = vpack.c.b16 %v1237, %v1233
        %v1546 = vpack.c.b16 %v1238, %v1234
        %v1547 = vpack.c.b16 %v1239, %v1235
        %v1548 = vpack.c.b16 %v1240, %v1236
        %v1549 = vpack.c.b16 %v1245, %v1241
        %v1550 = vpack.c.b16 %v1246, %v1242
        %v1551 = vpack.c.b16 %v1247, %v1243
        %v1552 = vpack.c.b16 %v1248, %v1244
        %v1553 = vpack.c.b16 %v1253, %v1249
        %v1554 = vpack.c.b16 %v1254, %v1250
        %v1555 = vpack.c.b16 %v1255, %v1251
        %v1556 = vpack.c.b16 %v1256, %v1252
        %v1557 = vpack.c.b16 %v1261, %v1257
        %v1558 = vpack.c.b16 %v1262, %v1258
        %v1559 = vpack.c.b16 %v1263, %v1259
        %v1560 = vpack.c.b16 %v1264, %v1260
        %v1561 = vpack.c.b16 %v1269, %v1265
        %v1562 = vpack.c.b16 %v1270, %v1266
        %v1563 = vpack.c.b16 %v1271, %v1267
        %v1564 = vpack.c.b16 %v1272, %v1268
        %v1565 = vpack.c.b16 %v1277, %v1273
        %v1566 = vpack.c.b16 %v1278, %v1274
        %v1567 = vpack.c.b16 %v1279, %v1275
        %v1568 = vpack.c.b16 %v1280, %v1276
        %v1569 = vpack.c.b16 %v1285, %v1281
        %v1570 = vpack.c.b16 %v1286, %v1282
        %v1571 = vpack.c.b16 %v1287, %v1283
        %v1572 = vpack.c.b16 %v1288, %v1284
        %v1573 = vpack.c.b16 %v1293, %v1289
        %v1574 = vpack.c.b16 %v1294, %v1290
        %v1575 = vpack.c.b16 %v1295, %v1291
        %v1576 = vpack.c.b16 %v1296, %v1292
        %v1577 = vpack.c.b16 %v1301, %v1297
        %v1578 = vpack.c.b16 %v1302, %v1298
        %v1579 = vpack.c.b16 %v1303, %v1299
        %v1580 = vpack.c.b16 %v1304, %v1300
        %v1581 = vpack.c.b16 %v1309, %v1305
        %v1582 = vpack.c.b16 %v1310, %v1306
        %v1583 = vpack.c.b16 %v1311, %v1307
        %v1584 = vpack.c.b16 %v1312, %v1308
        %v1585 = vpack.c.b16 %v1317, %v1313
        %v1586 = vpack.c.b16 %v1318, %v1314
        %v1587 = vpack.c.b16 %v1319, %v1315
        %v1588 = vpack.c.b16 %v1320, %v1316
        %v1589 = vpack.c.b16 %v1325, %v1321
        %v1590 = vpack.c.b16 %v1326, %v1322
        %v1591 = vpack.c.b16 %v1327, %v1323
        %v1592 = vpack.c.b16 %v1328, %v1324
        %v1593 = vpack.c.b16 %v1333, %v1329
        %v1594 = vpack.c.b16 %v1334, %v1330
        %v1595 = vpack.c.b16 %v1335, %v1331
        %v1596 = vpack.c.b16 %v1336, %v1332
        %v1597 = vpack.c.b16 %v1341, %v1337
        %v1598 = vpack.c.b16 %v1342, %v1338
        %v1599 = vpack.c.b16 %v1343, %v1339
        %v1600 = vpack.c.b16 %v1344, %v1340
        %1857 = vmatprep.subr.bf16.mxu0 %v1346
        %1858 = vmatpush1.bf16.msra.mxu0 %v1345
        %1859 = vmatprep.subr.bf16.mxu0 %v1350
        %1860 = vmatpush1.bf16.msra.mxu0 %v1349
        %1861 = vmatprep.subr.bf16.mxu0 %v1354
        %1862 = vmatpush1.bf16.msra.mxu0 %v1353
        %1863 = vmatprep.subr.bf16.mxu0 %v1358
        %1864 = vmatpush1.bf16.msra.mxu0 %v1357
        %1865 = vmatprep.subr.bf16.mxu0 %v1362
        %1866 = vmatpush1.bf16.msra.mxu0 %v1361
        %1867 = vmatprep.subr.bf16.mxu0 %v1366
        %1868 = vmatpush1.bf16.msra.mxu0 %v1365
        %1869 = vmatprep.subr.bf16.mxu0 %v1370
        %1870 = vmatpush1.bf16.msra.mxu0 %v1369
        %1871 = vmatprep.subr.bf16.mxu0 %v1374
        %1872 = vmatpush1.bf16.msra.mxu0 %v1373
        %1873 = vmatprep.subr.bf16.mxu0 %v1378
        %1874 = vmatpush1.bf16.msra.mxu0 %v1377
        %1875 = vmatprep.subr.bf16.mxu0 %v1382
        %1876 = vmatpush1.bf16.msra.mxu0 %v1381
        %1877 = vmatprep.subr.bf16.mxu0 %v1386
        %1878 = vmatpush1.bf16.msra.mxu0 %v1385
        %1879 = vmatprep.subr.bf16.mxu0 %v1390
        %1880 = vmatpush1.bf16.msra.mxu0 %v1389
        %1881 = vmatprep.subr.bf16.mxu0 %v1394
        %1882 = vmatpush1.bf16.msra.mxu0 %v1393
        %1883 = vmatprep.subr.bf16.mxu0 %v1398
        %1884 = vmatpush1.bf16.msra.mxu0 %v1397
        %1885 = vmatprep.subr.bf16.mxu0 %v1402
        %1886 = vmatpush1.bf16.msra.mxu0 %v1401
        %1887 = vmatprep.subr.bf16.mxu0 %v1406
        %1888 = vmatpush1.bf16.msra.mxu0 %v1405
        %1889 = vmatprep.mubr.bf16.mxu0 %v557
        %1890 = vmatmul.mubr.bf16.gmra.mrb[0].mxu0 %v543
        %v1891 = vpop.f32.mrb[0].mxu0
        %v1892 = vadd.f32 0.0, %v1891
        %v1893 = vpop.f32.mrb[0].mxu0
        %v1894 = vadd.f32 0.0, %v1893
        %v1895 = vpop.f32.mrb[0].mxu0
        %v1896 = vpop.f32.mrb[0].mxu0
        %1897 = vdwg.mxu0
        %1898 = vmatprep.subr.bf16.mxu0 %v1410
        %1899 = vmatpush1.bf16.msra.mxu0 %v1409
        %1900 = vmatprep.subr.bf16.mxu0 %v1414
        %1901 = vmatpush1.bf16.msra.mxu0 %v1413
        %1902 = vmatprep.subr.bf16.mxu0 %v1418
        %1903 = vmatpush1.bf16.msra.mxu0 %v1417
        %1904 = vmatprep.subr.bf16.mxu0 %v1422
        %1905 = vmatpush1.bf16.msra.mxu0 %v1421
        %1906 = vmatprep.subr.bf16.mxu0 %v1426
        %1907 = vmatpush1.bf16.msra.mxu0 %v1425
        %1908 = vmatprep.subr.bf16.mxu0 %v1430
        %1909 = vmatpush1.bf16.msra.mxu0 %v1429
        %1910 = vmatprep.subr.bf16.mxu0 %v1434
        %1911 = vmatpush1.bf16.msra.mxu0 %v1433
        %1912 = vmatprep.subr.bf16.mxu0 %v1438
        %1913 = vmatpush1.bf16.msra.mxu0 %v1437
        %1914 = vmatprep.subr.bf16.mxu0 %v1442
        %1915 = vmatpush1.bf16.msra.mxu0 %v1441
        %1916 = vmatprep.subr.bf16.mxu0 %v1446
        %1917 = vmatpush1.bf16.msra.mxu0 %v1445
        %1918 = vmatprep.subr.bf16.mxu0 %v1450
        %1919 = vmatpush1.bf16.msra.mxu0 %v1449
        %1920 = vmatprep.subr.bf16.mxu0 %v1454
        %1921 = vmatpush1.bf16.msra.mxu0 %v1453
        %1922 = vmatprep.subr.bf16.mxu0 %v1458
        %1923 = vmatpush1.bf16.msra.mxu0 %v1457
        %1924 = vmatprep.subr.bf16.mxu0 %v1462
        %1925 = vmatpush1.bf16.msra.mxu0 %v1461
        %1926 = vmatprep.subr.bf16.mxu0 %v1466
        %1927 = vmatpush1.bf16.msra.mxu0 %v1465
        %1928 = vmatprep.subr.bf16.mxu0 %v1470
        %1929 = vmatpush1.bf16.msra.mxu0 %v1469
        %1930 = vmatprep.mubr.bf16.mxu0 %v567
        %1931 = vmatmul.mubr.bf16.gmra.mrb[0].mxu0 %v565
        %v1932 = vpop.f32.mrb[0].mxu0
        %v1933 = vadd.f32 %v1892, %v1932
        %v1934 = vpop.f32.mrb[0].mxu0
        %v1935 = vadd.f32 %v1894, %v1934
        %v1936 = vpop.f32.mrb[0].mxu0
        %v1937 = vpop.f32.mrb[0].mxu0
        %1938 = vdwg.mxu0
        %1939 = vmatprep.subr.bf16.mxu0 %v1474
        %1940 = vmatpush1.bf16.msra.mxu0 %v1473
        %1941 = vmatprep.subr.bf16.mxu0 %v1478
        %1942 = vmatpush1.bf16.msra.mxu0 %v1477
        %1943 = vmatprep.subr.bf16.mxu0 %v1482
        %1944 = vmatpush1.bf16.msra.mxu0 %v1481
        %1945 = vmatprep.subr.bf16.mxu0 %v1486
        %1946 = vmatpush1.bf16.msra.mxu0 %v1485
        %1947 = vmatprep.subr.bf16.mxu0 %v1490
        %1948 = vmatpush1.bf16.msra.mxu0 %v1489
        %1949 = vmatprep.subr.bf16.mxu0 %v1494
        %1950 = vmatpush1.bf16.msra.mxu0 %v1493
        %1951 = vmatprep.subr.bf16.mxu0 %v1498
        %1952 = vmatpush1.bf16.msra.mxu0 %v1497
        %1953 = vmatprep.subr.bf16.mxu0 %v1502
        %1954 = vmatpush1.bf16.msra.mxu0 %v1501
        %1955 = vmatprep.subr.bf16.mxu0 %v1506
        %1956 = vmatpush1.bf16.msra.mxu0 %v1505
        %1957 = vmatprep.subr.bf16.mxu0 %v1510
        %1958 = vmatpush1.bf16.msra.mxu0 %v1509
        %1959 = vmatprep.subr.bf16.mxu0 %v1514
        %1960 = vmatpush1.bf16.msra.mxu0 %v1513
        %1961 = vmatprep.subr.bf16.mxu0 %v1518
        %1962 = vmatpush1.bf16.msra.mxu0 %v1517
        %1963 = vmatprep.subr.bf16.mxu0 %v1522
        %1964 = vmatpush1.bf16.msra.mxu0 %v1521
        %1965 = vmatprep.subr.bf16.mxu0 %v1526
        %1966 = vmatpush1.bf16.msra.mxu0 %v1525
        %1967 = vmatprep.subr.bf16.mxu0 %v1530
        %1968 = vmatpush1.bf16.msra.mxu0 %v1529
        %1969 = vmatprep.subr.bf16.mxu0 %v1534
        %1970 = vmatpush1.bf16.msra.mxu0 %v1533
        %1971 = vmatprep.mubr.bf16.mxu0 %v564
        %1972 = vmatmul.mubr.bf16.gmra.mrb[0].mxu0 %v550
        %v1973 = vpop.f32.mrb[0].mxu0
        %v1974 = vadd.f32 %v1933, %v1973
        %v1975 = vpop.f32.mrb[0].mxu0
        %v1976 = vadd.f32 %v1935, %v1975
        %v1977 = vpop.f32.mrb[0].mxu0
        %v1978 = vpop.f32.mrb[0].mxu0
        %1979 = vdwg.mxu0
        %1980 = vmatprep.subr.bf16.mxu0 %v1538
        %1981 = vmatpush1.bf16.msra.mxu0 %v1537
        %1982 = vmatprep.subr.bf16.mxu0 %v1542
        %1983 = vmatpush1.bf16.msra.mxu0 %v1541
        %1984 = vmatprep.subr.bf16.mxu0 %v1546
        %1985 = vmatpush1.bf16.msra.mxu0 %v1545
        %1986 = vmatprep.subr.bf16.mxu0 %v1550
        %1987 = vmatpush1.bf16.msra.mxu0 %v1549
        %1988 = vmatprep.subr.bf16.mxu0 %v1554
        %1989 = vmatpush1.bf16.msra.mxu0 %v1553
        %1990 = vmatprep.subr.bf16.mxu0 %v1558
        %1991 = vmatpush1.bf16.msra.mxu0 %v1557
        %1992 = vmatprep.subr.bf16.mxu0 %v1562
        %1993 = vmatpush1.bf16.msra.mxu0 %v1561
        %1994 = vmatprep.subr.bf16.mxu0 %v1566
        %1995 = vmatpush1.bf16.msra.mxu0 %v1565
        %1996 = vmatprep.subr.bf16.mxu0 %v1570
        %1997 = vmatpush1.bf16.msra.mxu0 %v1569
        %1998 = vmatprep.subr.bf16.mxu0 %v1574
        %1999 = vmatpush1.bf16.msra.mxu0 %v1573
        %2000 = vmatprep.subr.bf16.mxu0 %v1578
        %2001 = vmatpush1.bf16.msra.mxu0 %v1577
        %2002 = vmatprep.subr.bf16.mxu0 %v1582
        %2003 = vmatpush1.bf16.msra.mxu0 %v1581
        %2004 = vmatprep.subr.bf16.mxu0 %v1586
        %2005 = vmatpush1.bf16.msra.mxu0 %v1585
        %2006 = vmatprep.subr.bf16.mxu0 %v1590
        %2007 = vmatpush1.bf16.msra.mxu0 %v1589
        %2008 = vmatprep.subr.bf16.mxu0 %v1594
        %2009 = vmatpush1.bf16.msra.mxu0 %v1593
        %2010 = vmatprep.subr.bf16.mxu0 %v1598
        %2011 = vmatpush1.bf16.msra.mxu0 %v1597
        %2012 = vmatprep.mubr.bf16.mxu0 %v568
        %2013 = vmatmul.mubr.bf16.gmra.mrb[0].mxu0 %v566
        %v2014 = vpop.f32.mrb[0].mxu0
        %v2015 = vadd.f32 %v1974, %v2014
        %v2016 = vpop.f32.mrb[0].mxu0
        %v2017 = vadd.f32 %v1976, %v2016
        %v2018 = vpop.f32.mrb[0].mxu0
        %v2019 = vpop.f32.mrb[0].mxu0
        %2020 = vdwg.mxu0
        %2021 = vmatprep.subr.bf16.mxu0 %v1348
        %2022 = vmatpush1.bf16.msra.mxu0 %v1347
        %2023 = vmatprep.subr.bf16.mxu0 %v1352
        %2024 = vmatpush1.bf16.msra.mxu0 %v1351
        %2025 = vmatprep.subr.bf16.mxu0 %v1356
        %2026 = vmatpush1.bf16.msra.mxu0 %v1355
        %2027 = vmatprep.subr.bf16.mxu0 %v1360
        %2028 = vmatpush1.bf16.msra.mxu0 %v1359
        %2029 = vmatprep.subr.bf16.mxu0 %v1364
        %2030 = vmatpush1.bf16.msra.mxu0 %v1363
        %2031 = vmatprep.subr.bf16.mxu0 %v1368
        %2032 = vmatpush1.bf16.msra.mxu0 %v1367
        %2033 = vmatprep.subr.bf16.mxu0 %v1372
        %2034 = vmatpush1.bf16.msra.mxu0 %v1371
        %2035 = vmatprep.subr.bf16.mxu0 %v1376
        %2036 = vmatpush1.bf16.msra.mxu0 %v1375
        %2037 = vmatprep.subr.bf16.mxu0 %v1380
        %2038 = vmatpush1.bf16.msra.mxu0 %v1379
        %2039 = vmatprep.subr.bf16.mxu0 %v1384
        %2040 = vmatpush1.bf16.msra.mxu0 %v1383
        %2041 = vmatprep.subr.bf16.mxu0 %v1388
        %2042 = vmatpush1.bf16.msra.mxu0 %v1387
        %2043 = vmatprep.subr.bf16.mxu0 %v1392
        %2044 = vmatpush1.bf16.msra.mxu0 %v1391
        %2045 = vmatprep.subr.bf16.mxu0 %v1396
        %2046 = vmatpush1.bf16.msra.mxu0 %v1395
        %2047 = vmatprep.subr.bf16.mxu0 %v1400
        %2048 = vmatpush1.bf16.msra.mxu0 %v1399
        %2049 = vmatprep.subr.bf16.mxu0 %v1404
        %2050 = vmatpush1.bf16.msra.mxu0 %v1403
        %2051 = vmatprep.subr.bf16.mxu0 %v1408
        %2052 = vmatpush1.bf16.msra.mxu0 %v1407
        %2053 = vmatprep.mubr.bf16.mxu0 %v557
        %2054 = vmatmul.mubr.bf16.gmra.mrb[0].mxu0 %v543
        %v2055 = vpop.f32.mrb[0].mxu0
        %v2056 = vadd.f32 0.0, %v2055
        %v2057 = vpop.f32.mrb[0].mxu0
        %v2058 = vadd.f32 0.0, %v2057
        %v2059 = vpop.f32.mrb[0].mxu0
        %v2060 = vpop.f32.mrb[0].mxu0
        %2061 = vdwg.mxu0
        %2062 = vmatprep.subr.bf16.mxu0 %v1412
        %2063 = vmatpush1.bf16.msra.mxu0 %v1411
        %2064 = vmatprep.subr.bf16.mxu0 %v1416
        %2065 = vmatpush1.bf16.msra.mxu0 %v1415
        %2066 = vmatprep.subr.bf16.mxu0 %v1420
        %2067 = vmatpush1.bf16.msra.mxu0 %v1419
        %2068 = vmatprep.subr.bf16.mxu0 %v1424
        %2069 = vmatpush1.bf16.msra.mxu0 %v1423
        %2070 = vmatprep.subr.bf16.mxu0 %v1428
        %2071 = vmatpush1.bf16.msra.mxu0 %v1427
        %2072 = vmatprep.subr.bf16.mxu0 %v1432
        %2073 = vmatpush1.bf16.msra.mxu0 %v1431
        %2074 = vmatprep.subr.bf16.mxu0 %v1436
        %2075 = vmatpush1.bf16.msra.mxu0 %v1435
        %2076 = vmatprep.subr.bf16.mxu0 %v1440
        %2077 = vmatpush1.bf16.msra.mxu0 %v1439
        %2078 = vmatprep.subr.bf16.mxu0 %v1444
        %2079 = vmatpush1.bf16.msra.mxu0 %v1443
        %2080 = vmatprep.subr.bf16.mxu0 %v1448
        %2081 = vmatpush1.bf16.msra.mxu0 %v1447
        %2082 = vmatprep.subr.bf16.mxu0 %v1452
        %2083 = vmatpush1.bf16.msra.mxu0 %v1451
        %2084 = vmatprep.subr.bf16.mxu0 %v1456
        %2085 = vmatpush1.bf16.msra.mxu0 %v1455
        %2086 = vmatprep.subr.bf16.mxu0 %v1460
        %2087 = vmatpush1.bf16.msra.mxu0 %v1459
        %2088 = vmatprep.subr.bf16.mxu0 %v1464
        %2089 = vmatpush1.bf16.msra.mxu0 %v1463
        %2090 = vmatprep.subr.bf16.mxu0 %v1468
        %2091 = vmatpush1.bf16.msra.mxu0 %v1467
        %2092 = vmatprep.subr.bf16.mxu0 %v1472
        %2093 = vmatpush1.bf16.msra.mxu0 %v1471
        %2094 = vmatprep.mubr.bf16.mxu0 %v567
        %2095 = vmatmul.mubr.bf16.gmra.mrb[0].mxu0 %v565
        %v2096 = vpop.f32.mrb[0].mxu0
        %v2097 = vadd.f32 %v2056, %v2096
        %v2098 = vpop.f32.mrb[0].mxu0
        %v2099 = vadd.f32 %v2058, %v2098
        %v2100 = vpop.f32.mrb[0].mxu0
        %v2101 = vpop.f32.mrb[0].mxu0
        %2102 = vdwg.mxu0
        %2103 = vmatprep.subr.bf16.mxu0 %v1476
        %2104 = vmatpush1.bf16.msra.mxu0 %v1475
        %2105 = vmatprep.subr.bf16.mxu0 %v1480
        %2106 = vmatpush1.bf16.msra.mxu0 %v1479
        %2107 = vmatprep.subr.bf16.mxu0 %v1484
        %2108 = vmatpush1.bf16.msra.mxu0 %v1483
        %2109 = vmatprep.subr.bf16.mxu0 %v1488
        %2110 = vmatpush1.bf16.msra.mxu0 %v1487
        %2111 = vmatprep.subr.bf16.mxu0 %v1492
        %2112 = vmatpush1.bf16.msra.mxu0 %v1491
        %2113 = vmatprep.subr.bf16.mxu0 %v1496
        %2114 = vmatpush1.bf16.msra.mxu0 %v1495
        %2115 = vmatprep.subr.bf16.mxu0 %v1500
        %2116 = vmatpush1.bf16.msra.mxu0 %v1499
        %2117 = vmatprep.subr.bf16.mxu0 %v1504
        %2118 = vmatpush1.bf16.msra.mxu0 %v1503
        %2119 = vmatprep.subr.bf16.mxu0 %v1508
        %2120 = vmatpush1.bf16.msra.mxu0 %v1507
        %2121 = vmatprep.subr.bf16.mxu0 %v1512
        %2122 = vmatpush1.bf16.msra.mxu0 %v1511
        %2123 = vmatprep.subr.bf16.mxu0 %v1516
        %2124 = vmatpush1.bf16.msra.mxu0 %v1515
        %2125 = vmatprep.subr.bf16.mxu0 %v1520
        %2126 = vmatpush1.bf16.msra.mxu0 %v1519
        %2127 = vmatprep.subr.bf16.mxu0 %v1524
        %2128 = vmatpush1.bf16.msra.mxu0 %v1523
        %2129 = vmatprep.subr.bf16.mxu0 %v1528
        %2130 = vmatpush1.bf16.msra.mxu0 %v1527
        %2131 = vmatprep.subr.bf16.mxu0 %v1532
        %2132 = vmatpush1.bf16.msra.mxu0 %v1531
        %2133 = vmatprep.subr.bf16.mxu0 %v1536
        %2134 = vmatpush1.bf16.msra.mxu0 %v1535
        %2135 = vmatprep.mubr.bf16.mxu0 %v564
        %2136 = vmatmul.mubr.bf16.gmra.mrb[0].mxu0 %v550
        %v2137 = vpop.f32.mrb[0].mxu0
        %v2138 = vadd.f32 %v2097, %v2137
        %v2139 = vpop.f32.mrb[0].mxu0
        %v2140 = vadd.f32 %v2099, %v2139
        %v2141 = vpop.f32.mrb[0].mxu0
        %v2142 = vpop.f32.mrb[0].mxu0
        %2143 = vdwg.mxu0
        %2144 = vmatprep.subr.bf16.mxu0 %v1540
        %2145 = vmatpush1.bf16.msra.mxu0 %v1539
        %2146 = vmatprep.subr.bf16.mxu0 %v1544
        %2147 = vmatpush1.bf16.msra.mxu0 %v1543
        %2148 = vmatprep.subr.bf16.mxu0 %v1548
        %2149 = vmatpush1.bf16.msra.mxu0 %v1547
        %2150 = vmatprep.subr.bf16.mxu0 %v1552
        %2151 = vmatpush1.bf16.msra.mxu0 %v1551
        %2152 = vmatprep.subr.bf16.mxu0 %v1556
        %2153 = vmatpush1.bf16.msra.mxu0 %v1555
        %2154 = vmatprep.subr.bf16.mxu0 %v1560
        %2155 = vmatpush1.bf16.msra.mxu0 %v1559
        %2156 = vmatprep.subr.bf16.mxu0 %v1564
        %2157 = vmatpush1.bf16.msra.mxu0 %v1563
        %2158 = vmatprep.subr.bf16.mxu0 %v1568
        %2159 = vmatpush1.bf16.msra.mxu0 %v1567
        %2160 = vmatprep.subr.bf16.mxu0 %v1572
        %2161 = vmatpush1.bf16.msra.mxu0 %v1571
        %2162 = vmatprep.subr.bf16.mxu0 %v1576
        %2163 = vmatpush1.bf16.msra.mxu0 %v1575
        %2164 = vmatprep.subr.bf16.mxu0 %v1580
        %2165 = vmatpush1.bf16.msra.mxu0 %v1579
        %2166 = vmatprep.subr.bf16.mxu0 %v1584
        %2167 = vmatpush1.bf16.msra.mxu0 %v1583
        %2168 = vmatprep.subr.bf16.mxu0 %v1588
        %2169 = vmatpush1.bf16.msra.mxu0 %v1587
        %2170 = vmatprep.subr.bf16.mxu0 %v1592
        %2171 = vmatpush1.bf16.msra.mxu0 %v1591
        %2172 = vmatprep.subr.bf16.mxu0 %v1596
        %2173 = vmatpush1.bf16.msra.mxu0 %v1595
        %2174 = vmatprep.subr.bf16.mxu0 %v1600
        %2175 = vmatpush1.bf16.msra.mxu0 %v1599
        %2176 = vmatprep.mubr.bf16.mxu0 %v568
        %2177 = vmatmul.mubr.bf16.gmra.mrb[0].mxu0 %v566
        %v2178 = vpop.f32.mrb[0].mxu0
        %v2179 = vadd.f32 %v2138, %v2178
        %v2180 = vpop.f32.mrb[0].mxu0
        %v2181 = vadd.f32 %v2140, %v2180
        %v2182 = vpop.f32.mrb[0].mxu0
        %v2183 = vpop.f32.mrb[0].mxu0
        %2184 = vdwg.mxu0
        %v2189 = vcombine.low %v2015, %v2017
        %v2190 = vcombine.low %v2179, %v2181
        %v2192 = vunpack.c.l.s4 1966171168
        %v2193 = vunpack.c.0.s8 %v2192
        %v2194 = vlaneseq
        %v2195 = vshrl.u32 %v2194, 7
        %v2196 = vsub.s32 %v2193, %v2195
        %v2197 = vrot.slane %v2189, %v2196
        %v2199 = vunpack.c.l.s4 1966171168
        %v2200 = vunpack.c.0.s8 %v2199
        %v2201 = vlaneseq
        %v2202 = vshrl.u32 %v2201, 7
        %v2203 = vsub.s32 %v2200, %v2202
        %v2204 = vrot.slane %v2190, %v2203
        %v2205 = vcombine.low %v2197, %v2204
        %v2207 = vunpack.c.l.s4 1966171168
        %v2208 = vunpack.c.0.s8 %v2207
        %v2209 = vlaneseq
        %v2210 = vshrl.u32 %v2209, 7
        %v2211 = vsub.s32 %v2208, %v2210
        %v2212 = vrot.slane %v2205, %v2211
        %v2214 = vadd.f32 %v261, %v2212
        %v2215 = vlaneseq
        %vm2216 = vcmp.ge.s32.totalorder %v2215, 0
        %vm2217 = vcmp.lt.s32.totalorder %v2215, 512
        %vm2218 = vmand %vm2216, %vm2217
        %2219 = vst.msk [vmem:[#allocation2] sm:$0xf] %vm2218, %v2214
        %p2220 = scmp.eq.s32.totalorder %s19, 2
        // Predicated region
        $region53: #{network_interpolation_mlp_forward.1} parent=35 // pred_check
          %p2221 = pneg %p2220
        $region54: #{network_interpolation_mlp_forward.1} parent=35 // pred_check_branch
          %2223 = sbr.rel (%p2221) target = $region56
        $region55: #{network_interpolation_mlp_forward.1} parent=35 // pred_region
          %v2224 = vld [vmem:[#allocation5] sm:$0xff]
          %vm2225 = vcmask 64512
          %v2226 = vsel %vm2225, %v2224, 0.0
          %2227 = vadd.xlane.f32.xlu0 %v2226
          %v2228 = vpop.xlane.xlu0 %2227
          %v2229 = vld [vmem:[#allocation2] sm:$0xf]
          %v2231 = vlaneseq
          %v2232 = vshrl.u32 %v2231, 7
          %v2233 = vsub.s32 0, %v2232
          %v2234 = vrot.slane %v2229, %v2233
          %v2235 = vlaneseq
          %v2236 = vshrl.u32 %v2235, 7
          %v2237 = vsub.s32 1, %v2236
          %v2238 = vrot.slane %v2229, %v2237
          %v2239 = vlaneseq
          %v2240 = vshrl.u32 %v2239, 7
          %v2241 = vsub.s32 2, %v2240
          %v2242 = vrot.slane %v2229, %v2241
          %v2243 = vlaneseq
          %v2244 = vshrl.u32 %v2243, 7
          %v2245 = vsub.s32 3, %v2244
          %v2246 = vrot.slane %v2229, %v2245
          %v2251 = vmul.f32 %v2228, %v2234
          %v2252 = vmul.f32 %v2228, %v2238
          %v2253 = vmul.f32 %v2228, %v2242
          %v2254 = vmul.f32 %v2228, %v2246
          %vm2255 = vcmp.ge.f32.partialorder %v2251, 10.0
          %vm2256 = vcmp.ge.f32.partialorder %v2252, 10.0
          %vm2257 = vcmp.ge.f32.partialorder %v2253, 10.0
          %vm2258 = vcmp.ge.f32.partialorder %v2254, 10.0
          %v2259 = vsel %vm2255, 1, 0
          %v2260 = vsel %vm2256, 1, 0
          %v2261 = vsel %vm2257, 1, 0
          %v2262 = vsel %vm2258, 1, 0
          %v2263 = vcvt.s32.f32 %v2259
          %v2264 = vcvt.s32.f32 %v2260
          %v2265 = vcvt.s32.f32 %v2261
          %v2266 = vcvt.s32.f32 %v2262
          %v2267 = vpack.c.bf16 %v2263, %v2263
          %v2268 = vpack.c.bf16 %v2264, %v2264
          %v2269 = vpack.c.bf16 %v2265, %v2265
          %v2270 = vpack.c.bf16 %v2266, %v2266
          %v2271 = vld [vmem:[#allocation7] sm:$0xf]
          %v2272 = vld [vmem:[#allocation7 + $0x4] sm:$0xf]
          %v2273 = vld [vmem:[#allocation7 + $0x8] sm:$0xf]
          %v2274 = vld [vmem:[#allocation7 + $0xc] sm:$0xf]
          %v2275 = vld [vmem:[#allocation7 + $0x10] sm:$0xf]
          %v2276 = vld [vmem:[#allocation7 + $0x14] sm:$0xf]
          %v2277 = vld [vmem:[#allocation7 + $0x18] sm:$0xf]
          %v2278 = vld [vmem:[#allocation7 + $0x1c] sm:$0xf]
          %v2279 = vld [vmem:[#allocation7 + $0x20] sm:$0xf]
          %v2280 = vld [vmem:[#allocation7 + $0x24] sm:$0xf]
          %v2281 = vld [vmem:[#allocation7 + $0x28] sm:$0xf]
          %v2282 = vld [vmem:[#allocation7 + $0x2c] sm:$0xf]
          %v2283 = vld [vmem:[#allocation7 + $0x30] sm:$0xf]
          %v2284 = vld [vmem:[#allocation7 + $0x34] sm:$0xf]
          %v2285 = vld [vmem:[#allocation7 + $0x38] sm:$0xf]
          %v2286 = vld [vmem:[#allocation7 + $0x3c] sm:$0xf]
          %v2287 = vld [vmem:[#allocation7 + $0x40] sm:$0xf]
          %v2288 = vld [vmem:[#allocation7 + $0x44] sm:$0xf]
          %v2289 = vld [vmem:[#allocation7 + $0x48] sm:$0xf]
          %v2290 = vld [vmem:[#allocation7 + $0x4c] sm:$0xf]
          %v2291 = vld [vmem:[#allocation7 + $0x50] sm:$0xf]
          %v2292 = vld [vmem:[#allocation7 + $0x54] sm:$0xf]
          %v2293 = vld [vmem:[#allocation7 + $0x58] sm:$0xf]
          %v2294 = vld [vmem:[#allocation7 + $0x5c] sm:$0xf]
          %v2295 = vld [vmem:[#allocation7 + $0x60] sm:$0xf]
          %v2296 = vld [vmem:[#allocation7 + $0x64] sm:$0xf]
          %v2297 = vld [vmem:[#allocation7 + $0x68] sm:$0xf]
          %v2298 = vld [vmem:[#allocation7 + $0x6c] sm:$0xf]
          %v2299 = vld [vmem:[#allocation7 + $0x70] sm:$0xf]
          %v2300 = vld [vmem:[#allocation7 + $0x74] sm:$0xf]
          %v2301 = vld [vmem:[#allocation7 + $0x78] sm:$0xf]
          %v2302 = vld [vmem:[#allocation7 + $0x7c] sm:$0xf]
          %v2303 = vld [vmem:[#allocation7 + $0x80] sm:$0xf]
          %v2304 = vld [vmem:[#allocation7 + $0x84] sm:$0xf]
          %v2305 = vld [vmem:[#allocation7 + $0x88] sm:$0xf]
          %v2306 = vld [vmem:[#allocation7 + $0x8c] sm:$0xf]
          %v2307 = vld [vmem:[#allocation7 + $0x90] sm:$0xf]
          %v2308 = vld [vmem:[#allocation7 + $0x94] sm:$0xf]
          %v2309 = vld [vmem:[#allocation7 + $0x98] sm:$0xf]
          %v2310 = vld [vmem:[#allocation7 + $0x9c] sm:$0xf]
          %v2311 = vld [vmem:[#allocation7 + $0xa0] sm:$0xf]
          %v2312 = vld [vmem:[#allocation7 + $0xa4] sm:$0xf]
          %v2313 = vld [vmem:[#allocation7 + $0xa8] sm:$0xf]
          %v2314 = vld [vmem:[#allocation7 + $0xac] sm:$0xf]
          %v2315 = vld [vmem:[#allocation7 + $0xb0] sm:$0xf]
          %v2316 = vld [vmem:[#allocation7 + $0xb4] sm:$0xf]
          %v2317 = vld [vmem:[#allocation7 + $0xb8] sm:$0xf]
          %v2318 = vld [vmem:[#allocation7 + $0xbc] sm:$0xf]
          %v2319 = vld [vmem:[#allocation7 + $0xc0] sm:$0xf]
          %v2320 = vld [vmem:[#allocation7 + $0xc4] sm:$0xf]
          %v2321 = vld [vmem:[#allocation7 + $0xc8] sm:$0xf]
          %v2322 = vld [vmem:[#allocation7 + $0xcc] sm:$0xf]
          %v2323 = vld [vmem:[#allocation7 + $0xd0] sm:$0xf]
          %v2324 = vld [vmem:[#allocation7 + $0xd4] sm:$0xf]
          %v2325 = vld [vmem:[#allocation7 + $0xd8] sm:$0xf]
          %v2326 = vld [vmem:[#allocation7 + $0xdc] sm:$0xf]
          %v2327 = vld [vmem:[#allocation7 + $0xe0] sm:$0xf]
          %v2328 = vld [vmem:[#allocation7 + $0xe4] sm:$0xf]
          %v2329 = vld [vmem:[#allocation7 + $0xe8] sm:$0xf]
          %v2330 = vld [vmem:[#allocation7 + $0xec] sm:$0xf]
          %v2331 = vld [vmem:[#allocation7 + $0xf0] sm:$0xf]
          %v2332 = vld [vmem:[#allocation7 + $0xf4] sm:$0xf]
          %v2333 = vld [vmem:[#allocation7 + $0xf8] sm:$0xf]
          %v2334 = vld [vmem:[#allocation7 + $0xfc] sm:$0xf]
          %v2399 = vunpack.c.l.b16 %v2271
          %v2400 = vunpack.c.l.b16 %v2272
          %v2401 = vunpack.c.l.b16 %v2273
          %v2402 = vunpack.c.l.b16 %v2274
          %v2403 = vunpack.c.l.b16 %v2275
          %v2404 = vunpack.c.l.b16 %v2276
          %v2405 = vunpack.c.l.b16 %v2277
          %v2406 = vunpack.c.l.b16 %v2278
          %v2407 = vunpack.c.l.b16 %v2279
          %v2408 = vunpack.c.l.b16 %v2280
          %v2409 = vunpack.c.l.b16 %v2281
          %v2410 = vunpack.c.l.b16 %v2282
          %v2411 = vunpack.c.l.b16 %v2283
          %v2412 = vunpack.c.l.b16 %v2284
          %v2413 = vunpack.c.l.b16 %v2285
          %v2414 = vunpack.c.l.b16 %v2286
          %v2415 = vunpack.c.l.b16 %v2287
          %v2416 = vunpack.c.l.b16 %v2288
          %v2417 = vunpack.c.l.b16 %v2289
          %v2418 = vunpack.c.l.b16 %v2290
          %v2419 = vunpack.c.l.b16 %v2291
          %v2420 = vunpack.c.l.b16 %v2292
          %v2421 = vunpack.c.l.b16 %v2293
          %v2422 = vunpack.c.l.b16 %v2294
          %v2423 = vunpack.c.l.b16 %v2295
          %v2424 = vunpack.c.l.b16 %v2296
          %v2425 = vunpack.c.l.b16 %v2297
          %v2426 = vunpack.c.l.b16 %v2298
          %v2427 = vunpack.c.l.b16 %v2299
          %v2428 = vunpack.c.l.b16 %v2300
          %v2429 = vunpack.c.l.b16 %v2301
          %v2430 = vunpack.c.l.b16 %v2302
          %v2431 = vunpack.c.l.b16 %v2303
          %v2432 = vunpack.c.l.b16 %v2304
          %v2433 = vunpack.c.l.b16 %v2305
          %v2434 = vunpack.c.l.b16 %v2306
          %v2435 = vunpack.c.l.b16 %v2307
          %v2436 = vunpack.c.l.b16 %v2308
          %v2437 = vunpack.c.l.b16 %v2309
          %v2438 = vunpack.c.l.b16 %v2310
          %v2439 = vunpack.c.l.b16 %v2311
          %v2440 = vunpack.c.l.b16 %v2312
          %v2441 = vunpack.c.l.b16 %v2313
          %v2442 = vunpack.c.l.b16 %v2314
          %v2443 = vunpack.c.l.b16 %v2315
          %v2444 = vunpack.c.l.b16 %v2316
          %v2445 = vunpack.c.l.b16 %v2317
          %v2446 = vunpack.c.l.b16 %v2318
          %v2447 = vunpack.c.l.b16 %v2319
          %v2448 = vunpack.c.l.b16 %v2320
          %v2449 = vunpack.c.l.b16 %v2321
          %v2450 = vunpack.c.l.b16 %v2322
          %v2451 = vunpack.c.l.b16 %v2323
          %v2452 = vunpack.c.l.b16 %v2324
          %v2453 = vunpack.c.l.b16 %v2325
          %v2454 = vunpack.c.l.b16 %v2326
          %v2455 = vunpack.c.l.b16 %v2327
          %v2456 = vunpack.c.l.b16 %v2328
          %v2457 = vunpack.c.l.b16 %v2329
          %v2458 = vunpack.c.l.b16 %v2330
          %v2459 = vunpack.c.l.b16 %v2331
          %v2460 = vunpack.c.l.b16 %v2332
          %v2461 = vunpack.c.l.b16 %v2333
          %v2462 = vunpack.c.l.b16 %v2334
          %v2463 = vpack.c.b16 %v2400, %v2399
          %v2464 = vpack.c.b16 %v2402, %v2401
          %v2465 = vpack.c.b16 %v2404, %v2403
          %v2466 = vpack.c.b16 %v2406, %v2405
          %v2467 = vpack.c.b16 %v2408, %v2407
          %v2468 = vpack.c.b16 %v2410, %v2409
          %v2469 = vpack.c.b16 %v2412, %v2411
          %v2470 = vpack.c.b16 %v2414, %v2413
          %v2471 = vpack.c.b16 %v2416, %v2415
          %v2472 = vpack.c.b16 %v2418, %v2417
          %v2473 = vpack.c.b16 %v2420, %v2419
          %v2474 = vpack.c.b16 %v2422, %v2421
          %v2475 = vpack.c.b16 %v2424, %v2423
          %v2476 = vpack.c.b16 %v2426, %v2425
          %v2477 = vpack.c.b16 %v2428, %v2427
          %v2478 = vpack.c.b16 %v2430, %v2429
          %v2479 = vpack.c.b16 %v2432, %v2431
          %v2480 = vpack.c.b16 %v2434, %v2433
          %v2481 = vpack.c.b16 %v2436, %v2435
          %v2482 = vpack.c.b16 %v2438, %v2437
          %v2483 = vpack.c.b16 %v2440, %v2439
          %v2484 = vpack.c.b16 %v2442, %v2441
          %v2485 = vpack.c.b16 %v2444, %v2443
          %v2486 = vpack.c.b16 %v2446, %v2445
          %v2487 = vpack.c.b16 %v2448, %v2447
          %v2488 = vpack.c.b16 %v2450, %v2449
          %v2489 = vpack.c.b16 %v2452, %v2451
          %v2490 = vpack.c.b16 %v2454, %v2453
          %v2491 = vpack.c.b16 %v2456, %v2455
          %v2492 = vpack.c.b16 %v2458, %v2457
          %v2493 = vpack.c.b16 %v2460, %v2459
          %v2494 = vpack.c.b16 %v2462, %v2461
          %2527 = vmatprep.subr.bf16.mxu0 0
          %2528 = vmatpush1.bf16.msra.mxu0 %v2463
          %2529 = vmatprep.subr.bf16.mxu0 0
          %2530 = vmatpush1.bf16.msra.mxu0 %v2464
          %2531 = vmatprep.subr.bf16.mxu0 0
          %2532 = vmatpush1.bf16.msra.mxu0 %v2465
          %2533 = vmatprep.subr.bf16.mxu0 0
          %2534 = vmatpush1.bf16.msra.mxu0 %v2466
          %2535 = vmatprep.subr.bf16.mxu0 0
          %2536 = vmatpush1.bf16.msra.mxu0 %v2467
          %2537 = vmatprep.subr.bf16.mxu0 0
          %2538 = vmatpush1.bf16.msra.mxu0 %v2468
          %2539 = vmatprep.subr.bf16.mxu0 0
          %2540 = vmatpush1.bf16.msra.mxu0 %v2469
          %2541 = vmatprep.subr.bf16.mxu0 0
          %2542 = vmatpush1.bf16.msra.mxu0 %v2470
          %2543 = vmatprep.subr.bf16.mxu0 0
          %2544 = vmatpush1.bf16.msra.mxu0 %v2471
          %2545 = vmatprep.subr.bf16.mxu0 0
          %2546 = vmatpush1.bf16.msra.mxu0 %v2472
          %2547 = vmatprep.subr.bf16.mxu0 0
          %2548 = vmatpush1.bf16.msra.mxu0 %v2473
          %2549 = vmatprep.subr.bf16.mxu0 0
          %2550 = vmatpush1.bf16.msra.mxu0 %v2474
          %2551 = vmatprep.subr.bf16.mxu0 0
          %2552 = vmatpush1.bf16.msra.mxu0 %v2475
          %2553 = vmatprep.subr.bf16.mxu0 0
          %2554 = vmatpush1.bf16.msra.mxu0 %v2476
          %2555 = vmatprep.subr.bf16.mxu0 0
          %2556 = vmatpush1.bf16.msra.mxu0 %v2477
          %2557 = vmatprep.subr.bf16.mxu0 0
          %2558 = vmatpush1.bf16.msra.mxu0 %v2478
          %2559 = vmatprep.mubr.bf16.mxu0 %v2268
          %2560 = vmatmul.mubr.bf16.gmra.mrb[0].mxu0 %v2267
          %v2561 = vpop.f32.mrb[0].mxu0
          %v2562 = vadd.f32 0.0, %v2561
          %v2563 = vpop.f32.mrb[0].mxu0
          %v2564 = vpop.f32.mrb[0].mxu0
          %v2565 = vpop.f32.mrb[0].mxu0
          %2566 = vdwg.mxu0
          %2567 = vmatprep.subr.bf16.mxu0 0
          %2568 = vmatpush1.bf16.msra.mxu0 %v2479
          %2569 = vmatprep.subr.bf16.mxu0 0
          %2570 = vmatpush1.bf16.msra.mxu0 %v2480
          %2571 = vmatprep.subr.bf16.mxu0 0
          %2572 = vmatpush1.bf16.msra.mxu0 %v2481
          %2573 = vmatprep.subr.bf16.mxu0 0
          %2574 = vmatpush1.bf16.msra.mxu0 %v2482
          %2575 = vmatprep.subr.bf16.mxu0 0
          %2576 = vmatpush1.bf16.msra.mxu0 %v2483
          %2577 = vmatprep.subr.bf16.mxu0 0
          %2578 = vmatpush1.bf16.msra.mxu0 %v2484
          %2579 = vmatprep.subr.bf16.mxu0 0
          %2580 = vmatpush1.bf16.msra.mxu0 %v2485
          %2581 = vmatprep.subr.bf16.mxu0 0
          %2582 = vmatpush1.bf16.msra.mxu0 %v2486
          %2583 = vmatprep.subr.bf16.mxu0 0
          %2584 = vmatpush1.bf16.msra.mxu0 %v2487
          %2585 = vmatprep.subr.bf16.mxu0 0
          %2586 = vmatpush1.bf16.msra.mxu0 %v2488
          %2587 = vmatprep.subr.bf16.mxu0 0
          %2588 = vmatpush1.bf16.msra.mxu0 %v2489
          %2589 = vmatprep.subr.bf16.mxu0 0
          %2590 = vmatpush1.bf16.msra.mxu0 %v2490
          %2591 = vmatprep.subr.bf16.mxu0 0
          %2592 = vmatpush1.bf16.msra.mxu0 %v2491
          %2593 = vmatprep.subr.bf16.mxu0 0
          %2594 = vmatpush1.bf16.msra.mxu0 %v2492
          %2595 = vmatprep.subr.bf16.mxu0 0
          %2596 = vmatpush1.bf16.msra.mxu0 %v2493
          %2597 = vmatprep.subr.bf16.mxu0 0
          %2598 = vmatpush1.bf16.msra.mxu0 %v2494
          %2599 = vmatprep.mubr.bf16.mxu0 %v2270
          %2600 = vmatmul.mubr.bf16.gmra.mrb[0].mxu0 %v2269
          %v2601 = vpop.f32.mrb[0].mxu0
          %v2602 = vadd.f32 %v2562, %v2601
          %v2603 = vpop.f32.mrb[0].mxu0
          %v2604 = vpop.f32.mrb[0].mxu0
          %v2605 = vpop.f32.mrb[0].mxu0
          %2606 = vdwg.mxu0
          %v2608 = vsel %vm2225, %v2224, 0
          %2610 = vmatprep.subr.mxu0 0.0
          %v2611 = vand.u32 %v2602, 4294901760
          %2612 = vmatpush1.msra.mxu0 %v2611
          %2613 = vmatprep.subr.mxu0 0.0
          %2614 = vmatpush1.msra.mxu0 0.0
          %2615 = vmatprep.subr.mxu0 0.0
          %2616 = vmatpush1.msra.mxu0 0.0
          %2617 = vmatprep.subr.mxu0 0.0
          %2618 = vmatpush1.msra.mxu0 0.0
          %2619 = vmatprep.subr.mxu0 0.0
          %2620 = vmatpush1.msra.mxu0 0.0
          %2621 = vmatprep.subr.mxu0 0.0
          %2622 = vmatpush1.msra.mxu0 0.0
          %2623 = vmatprep.subr.mxu0 0.0
          %2624 = vmatpush1.msra.mxu0 0.0
          %2625 = vmatprep.subr.mxu0 0.0
          %2626 = vmatpush1.msra.mxu0 0.0
          %2627 = vmatprep.subr.mxu0 0.0
          %2628 = vmatpush1.msra.mxu0 0.0
          %2629 = vmatprep.subr.mxu0 0.0
          %2630 = vmatpush1.msra.mxu0 0.0
          %2631 = vmatprep.subr.mxu0 0.0
          %2632 = vmatpush1.msra.mxu0 0.0
          %2633 = vmatprep.subr.mxu0 0.0
          %2634 = vmatpush1.msra.mxu0 0.0
          %2635 = vmatprep.subr.mxu0 0.0
          %2636 = vmatpush1.msra.mxu0 0.0
          %2637 = vmatprep.subr.mxu0 0.0
          %2638 = vmatpush1.msra.mxu0 0.0
          %2639 = vmatprep.subr.mxu0 0.0
          %2640 = vmatpush1.msra.mxu0 0.0
          %2641 = vmatprep.subr.mxu0 0.0
          %2642 = vmatpush1.msra.mxu0 0.0
          %2643 = vmatprep.subr.mxu0 0.0
          %2644 = vmatpush1.msra.mxu0 0.0
          %2645 = vmatprep.subr.mxu0 0.0
          %2646 = vmatpush1.msra.mxu0 0.0
          %2647 = vmatprep.subr.mxu0 0.0
          %2648 = vmatpush1.msra.mxu0 0.0
          %2649 = vmatprep.subr.mxu0 0.0
          %2650 = vmatpush1.msra.mxu0 0.0
          %2651 = vmatprep.subr.mxu0 0.0
          %2652 = vmatpush1.msra.mxu0 0.0
          %2653 = vmatprep.subr.mxu0 0.0
          %2654 = vmatpush1.msra.mxu0 0.0
          %2655 = vmatprep.subr.mxu0 0.0
          %2656 = vmatpush1.msra.mxu0 0.0
          %2657 = vmatprep.subr.mxu0 0.0
          %2658 = vmatpush1.msra.mxu0 0.0
          %2659 = vmatprep.subr.mxu0 0.0
          %2660 = vmatpush1.msra.mxu0 0.0
          %2661 = vmatprep.subr.mxu0 0.0
          %2662 = vmatpush1.msra.mxu0 0.0
          %2663 = vmatprep.subr.mxu0 0.0
          %2664 = vmatpush1.msra.mxu0 0.0
          %2665 = vmatprep.subr.mxu0 0.0
          %2666 = vmatpush1.msra.mxu0 0.0
          %2667 = vmatprep.subr.mxu0 0.0
          %2668 = vmatpush1.msra.mxu0 0.0
          %2669 = vmatprep.subr.mxu0 0.0
          %2670 = vmatpush1.msra.mxu0 0.0
          %2671 = vmatprep.subr.mxu0 0.0
          %2672 = vmatpush1.msra.mxu0 0.0
          %2673 = vmatprep.subr.mxu0 0.0
          %2674 = vmatpush1.msra.mxu0 0.0
          %2675 = vmatprep.mubr.f32.mxu0 0.0
          %v2676 = vand.u32 %v2608, 4294901760
          %v2677 = vsub.f32 %v2608, %v2676
          %v2678 = vand.u32 %v2677, 4294901760
          %v2679 = vsub.f32 %v2677, %v2678
          %v2680 = vand.u32 %v2679, 4294901760
          %2681 = vmatmul.mubr.f32.gmra.mrb[0].mxu0 %v2680
          %v2682 = vpop.f32.mrb[0].mxu0
          %v2683 = vadd.f32 0.0, %v2682
          %v2684 = vpop.f32.mrb[0].mxu0
          %2685 = vdwg.mxu0
          %2686 = vmatprep.subr.mxu0 0.0
          %v2687 = vand.u32 %v2602, 4294901760
          %v2688 = vsub.f32 %v2602, %v2687
          %v2689 = vand.u32 %v2688, 4294901760
          %v2690 = vsub.f32 %v2688, %v2689
          %v2691 = vand.u32 %v2690, 4294901760
          %2692 = vmatpush1.msra.mxu0 %v2691
          %2693 = vmatprep.subr.mxu0 0.0
          %2694 = vmatpush1.msra.mxu0 0.0
          %2695 = vmatprep.subr.mxu0 0.0
          %2696 = vmatpush1.msra.mxu0 0.0
          %2697 = vmatprep.subr.mxu0 0.0
          %2698 = vmatpush1.msra.mxu0 0.0
          %2699 = vmatprep.subr.mxu0 0.0
          %2700 = vmatpush1.msra.mxu0 0.0
          %2701 = vmatprep.subr.mxu0 0.0
          %2702 = vmatpush1.msra.mxu0 0.0
          %2703 = vmatprep.subr.mxu0 0.0
          %2704 = vmatpush1.msra.mxu0 0.0
          %2705 = vmatprep.subr.mxu0 0.0
          %2706 = vmatpush1.msra.mxu0 0.0
          %2707 = vmatprep.subr.mxu0 0.0
          %2708 = vmatpush1.msra.mxu0 0.0
          %2709 = vmatprep.subr.mxu0 0.0
          %2710 = vmatpush1.msra.mxu0 0.0
          %2711 = vmatprep.subr.mxu0 0.0
          %2712 = vmatpush1.msra.mxu0 0.0
          %2713 = vmatprep.subr.mxu0 0.0
          %2714 = vmatpush1.msra.mxu0 0.0
          %2715 = vmatprep.subr.mxu0 0.0
          %2716 = vmatpush1.msra.mxu0 0.0
          %2717 = vmatprep.subr.mxu0 0.0
          %2718 = vmatpush1.msra.mxu0 0.0
          %2719 = vmatprep.subr.mxu0 0.0
          %2720 = vmatpush1.msra.mxu0 0.0
          %2721 = vmatprep.subr.mxu0 0.0
          %2722 = vmatpush1.msra.mxu0 0.0
          %2723 = vmatprep.subr.mxu0 0.0
          %2724 = vmatpush1.msra.mxu0 0.0
          %2725 = vmatprep.subr.mxu0 0.0
          %2726 = vmatpush1.msra.mxu0 0.0
          %2727 = vmatprep.subr.mxu0 0.0
          %2728 = vmatpush1.msra.mxu0 0.0
          %2729 = vmatprep.subr.mxu0 0.0
          %2730 = vmatpush1.msra.mxu0 0.0
          %2731 = vmatprep.subr.mxu0 0.0
          %2732 = vmatpush1.msra.mxu0 0.0
          %2733 = vmatprep.subr.mxu0 0.0
          %2734 = vmatpush1.msra.mxu0 0.0
          %2735 = vmatprep.subr.mxu0 0.0
          %2736 = vmatpush1.msra.mxu0 0.0
          %2737 = vmatprep.subr.mxu0 0.0
          %2738 = vmatpush1.msra.mxu0 0.0
          %2739 = vmatprep.subr.mxu0 0.0
          %2740 = vmatpush1.msra.mxu0 0.0
          %2741 = vmatprep.subr.mxu0 0.0
          %2742 = vmatpush1.msra.mxu0 0.0
          %2743 = vmatprep.subr.mxu0 0.0
          %2744 = vmatpush1.msra.mxu0 0.0
          %2745 = vmatprep.subr.mxu0 0.0
          %2746 = vmatpush1.msra.mxu0 0.0
          %2747 = vmatprep.subr.mxu0 0.0
          %2748 = vmatpush1.msra.mxu0 0.0
          %2749 = vmatprep.subr.mxu0 0.0
          %2750 = vmatpush1.msra.mxu0 0.0
          %2751 = vmatprep.subr.mxu0 0.0
          %2752 = vmatpush1.msra.mxu0 0.0
          %2753 = vmatprep.subr.mxu0 0.0
          %2754 = vmatpush1.msra.mxu0 0.0
          %2755 = vmatprep.mubr.f32.mxu0 0.0
          %v2756 = vand.u32 %v2608, 4294901760
          %2757 = vmatmul.mubr.f32.gmra.mrb[0].mxu0 %v2756
          %v2758 = vpop.f32.mrb[0].mxu0
          %v2759 = vadd.f32 %v2683, %v2758
          %v2760 = vpop.f32.mrb[0].mxu0
          %2761 = vdwg.mxu0
          %2762 = vmatprep.subr.mxu0 0.0
          %v2763 = vand.u32 %v2602, 4294901760
          %v2764 = vsub.f32 %v2602, %v2763
          %2765 = vmatpush1.msra.mxu0 %v2764
          %2766 = vmatprep.subr.mxu0 0.0
          %2767 = vmatpush1.msra.mxu0 0.0
          %2768 = vmatprep.subr.mxu0 0.0
          %2769 = vmatpush1.msra.mxu0 0.0
          %2770 = vmatprep.subr.mxu0 0.0
          %2771 = vmatpush1.msra.mxu0 0.0
          %2772 = vmatprep.subr.mxu0 0.0
          %2773 = vmatpush1.msra.mxu0 0.0
          %2774 = vmatprep.subr.mxu0 0.0
          %2775 = vmatpush1.msra.mxu0 0.0
          %2776 = vmatprep.subr.mxu0 0.0
          %2777 = vmatpush1.msra.mxu0 0.0
          %2778 = vmatprep.subr.mxu0 0.0
          %2779 = vmatpush1.msra.mxu0 0.0
          %2780 = vmatprep.subr.mxu0 0.0
          %2781 = vmatpush1.msra.mxu0 0.0
          %2782 = vmatprep.subr.mxu0 0.0
          %2783 = vmatpush1.msra.mxu0 0.0
          %2784 = vmatprep.subr.mxu0 0.0
          %2785 = vmatpush1.msra.mxu0 0.0
          %2786 = vmatprep.subr.mxu0 0.0
          %2787 = vmatpush1.msra.mxu0 0.0
          %2788 = vmatprep.subr.mxu0 0.0
          %2789 = vmatpush1.msra.mxu0 0.0
          %2790 = vmatprep.subr.mxu0 0.0
          %2791 = vmatpush1.msra.mxu0 0.0
          %2792 = vmatprep.subr.mxu0 0.0
          %2793 = vmatpush1.msra.mxu0 0.0
          %2794 = vmatprep.subr.mxu0 0.0
          %2795 = vmatpush1.msra.mxu0 0.0
          %2796 = vmatprep.subr.mxu0 0.0
          %2797 = vmatpush1.msra.mxu0 0.0
          %2798 = vmatprep.subr.mxu0 0.0
          %2799 = vmatpush1.msra.mxu0 0.0
          %2800 = vmatprep.subr.mxu0 0.0
          %2801 = vmatpush1.msra.mxu0 0.0
          %2802 = vmatprep.subr.mxu0 0.0
          %2803 = vmatpush1.msra.mxu0 0.0
          %2804 = vmatprep.subr.mxu0 0.0
          %2805 = vmatpush1.msra.mxu0 0.0
          %2806 = vmatprep.subr.mxu0 0.0
          %2807 = vmatpush1.msra.mxu0 0.0
          %2808 = vmatprep.subr.mxu0 0.0
          %2809 = vmatpush1.msra.mxu0 0.0
          %2810 = vmatprep.subr.mxu0 0.0
          %2811 = vmatpush1.msra.mxu0 0.0
          %2812 = vmatprep.subr.mxu0 0.0
          %2813 = vmatpush1.msra.mxu0 0.0
          %2814 = vmatprep.subr.mxu0 0.0
          %2815 = vmatpush1.msra.mxu0 0.0
          %2816 = vmatprep.subr.mxu0 0.0
          %2817 = vmatpush1.msra.mxu0 0.0
          %2818 = vmatprep.subr.mxu0 0.0
          %2819 = vmatpush1.msra.mxu0 0.0
          %2820 = vmatprep.subr.mxu0 0.0
          %2821 = vmatpush1.msra.mxu0 0.0
          %2822 = vmatprep.subr.mxu0 0.0
          %2823 = vmatpush1.msra.mxu0 0.0
          %2824 = vmatprep.subr.mxu0 0.0
          %2825 = vmatpush1.msra.mxu0 0.0
          %2826 = vmatprep.subr.mxu0 0.0
          %2827 = vmatpush1.msra.mxu0 0.0
          %2828 = vmatprep.mubr.f32.mxu0 0.0
          %v2829 = vand.u32 %v2608, 4294901760
          %v2830 = vsub.f32 %v2608, %v2829
          %2831 = vmatmul.mubr.f32.gmra.mrb[0].mxu0 %v2830
          %v2832 = vpop.f32.mrb[0].mxu0
          %v2833 = vadd.f32 %v2759, %v2832
          %v2834 = vpop.f32.mrb[0].mxu0
          %2835 = vdwg.mxu0
          %2836 = vmatprep.subr.mxu0 0.0
          %v2837 = vand.u32 %v2602, 4294901760
          %2838 = vmatpush1.msra.mxu0 %v2837
          %2839 = vmatprep.subr.mxu0 0.0
          %2840 = vmatpush1.msra.mxu0 0.0
          %2841 = vmatprep.subr.mxu0 0.0
          %2842 = vmatpush1.msra.mxu0 0.0
          %2843 = vmatprep.subr.mxu0 0.0
          %2844 = vmatpush1.msra.mxu0 0.0
          %2845 = vmatprep.subr.mxu0 0.0
          %2846 = vmatpush1.msra.mxu0 0.0
          %2847 = vmatprep.subr.mxu0 0.0
          %2848 = vmatpush1.msra.mxu0 0.0
          %2849 = vmatprep.subr.mxu0 0.0
          %2850 = vmatpush1.msra.mxu0 0.0
          %2851 = vmatprep.subr.mxu0 0.0
          %2852 = vmatpush1.msra.mxu0 0.0
          %2853 = vmatprep.subr.mxu0 0.0
          %2854 = vmatpush1.msra.mxu0 0.0
          %2855 = vmatprep.subr.mxu0 0.0
          %2856 = vmatpush1.msra.mxu0 0.0
          %2857 = vmatprep.subr.mxu0 0.0
          %2858 = vmatpush1.msra.mxu0 0.0
          %2859 = vmatprep.subr.mxu0 0.0
          %2860 = vmatpush1.msra.mxu0 0.0
          %2861 = vmatprep.subr.mxu0 0.0
          %2862 = vmatpush1.msra.mxu0 0.0
          %2863 = vmatprep.subr.mxu0 0.0
          %2864 = vmatpush1.msra.mxu0 0.0
          %2865 = vmatprep.subr.mxu0 0.0
          %2866 = vmatpush1.msra.mxu0 0.0
          %2867 = vmatprep.subr.mxu0 0.0
          %2868 = vmatpush1.msra.mxu0 0.0
          %2869 = vmatprep.subr.mxu0 0.0
          %2870 = vmatpush1.msra.mxu0 0.0
          %2871 = vmatprep.subr.mxu0 0.0
          %2872 = vmatpush1.msra.mxu0 0.0
          %2873 = vmatprep.subr.mxu0 0.0
          %2874 = vmatpush1.msra.mxu0 0.0
          %2875 = vmatprep.subr.mxu0 0.0
          %2876 = vmatpush1.msra.mxu0 0.0
          %2877 = vmatprep.subr.mxu0 0.0
          %2878 = vmatpush1.msra.mxu0 0.0
          %2879 = vmatprep.subr.mxu0 0.0
          %2880 = vmatpush1.msra.mxu0 0.0
          %2881 = vmatprep.subr.mxu0 0.0
          %2882 = vmatpush1.msra.mxu0 0.0
          %2883 = vmatprep.subr.mxu0 0.0
          %2884 = vmatpush1.msra.mxu0 0.0
          %2885 = vmatprep.subr.mxu0 0.0
          %2886 = vmatpush1.msra.mxu0 0.0
          %2887 = vmatprep.subr.mxu0 0.0
          %2888 = vmatpush1.msra.mxu0 0.0
          %2889 = vmatprep.subr.mxu0 0.0
          %2890 = vmatpush1.msra.mxu0 0.0
          %2891 = vmatprep.subr.mxu0 0.0
          %2892 = vmatpush1.msra.mxu0 0.0
          %2893 = vmatprep.subr.mxu0 0.0
          %2894 = vmatpush1.msra.mxu0 0.0
          %2895 = vmatprep.subr.mxu0 0.0
          %2896 = vmatpush1.msra.mxu0 0.0
          %2897 = vmatprep.subr.mxu0 0.0
          %2898 = vmatpush1.msra.mxu0 0.0
          %2899 = vmatprep.subr.mxu0 0.0
          %2900 = vmatpush1.msra.mxu0 0.0
          %2901 = vmatprep.mubr.f32.mxu0 0.0
          %v2902 = vand.u32 %v2608, 4294901760
          %v2903 = vsub.f32 %v2608, %v2902
          %v2904 = vand.u32 %v2903, 4294901760
          %2905 = vmatmul.mubr.f32.gmra.mrb[0].mxu0 %v2904
          %v2906 = vpop.f32.mrb[0].mxu0
          %v2907 = vadd.f32 %v2833, %v2906
          %v2908 = vpop.f32.mrb[0].mxu0
          %2909 = vdwg.mxu0
          %2910 = vmatprep.subr.mxu0 0.0
          %v2911 = vand.u32 %v2602, 4294901760
          %v2912 = vsub.f32 %v2602, %v2911
          %v2913 = vand.u32 %v2912, 4294901760
          %2914 = vmatpush1.msra.mxu0 %v2913
          %2915 = vmatprep.subr.mxu0 0.0
          %2916 = vmatpush1.msra.mxu0 0.0
          %2917 = vmatprep.subr.mxu0 0.0
          %2918 = vmatpush1.msra.mxu0 0.0
          %2919 = vmatprep.subr.mxu0 0.0
          %2920 = vmatpush1.msra.mxu0 0.0
          %2921 = vmatprep.subr.mxu0 0.0
          %2922 = vmatpush1.msra.mxu0 0.0
          %2923 = vmatprep.subr.mxu0 0.0
          %2924 = vmatpush1.msra.mxu0 0.0
          %2925 = vmatprep.subr.mxu0 0.0
          %2926 = vmatpush1.msra.mxu0 0.0
          %2927 = vmatprep.subr.mxu0 0.0
          %2928 = vmatpush1.msra.mxu0 0.0
          %2929 = vmatprep.subr.mxu0 0.0
          %2930 = vmatpush1.msra.mxu0 0.0
          %2931 = vmatprep.subr.mxu0 0.0
          %2932 = vmatpush1.msra.mxu0 0.0
          %2933 = vmatprep.subr.mxu0 0.0
          %2934 = vmatpush1.msra.mxu0 0.0
          %2935 = vmatprep.subr.mxu0 0.0
          %2936 = vmatpush1.msra.mxu0 0.0
          %2937 = vmatprep.subr.mxu0 0.0
          %2938 = vmatpush1.msra.mxu0 0.0
          %2939 = vmatprep.subr.mxu0 0.0
          %2940 = vmatpush1.msra.mxu0 0.0
          %2941 = vmatprep.subr.mxu0 0.0
          %2942 = vmatpush1.msra.mxu0 0.0
          %2943 = vmatprep.subr.mxu0 0.0
          %2944 = vmatpush1.msra.mxu0 0.0
          %2945 = vmatprep.subr.mxu0 0.0
          %2946 = vmatpush1.msra.mxu0 0.0
          %2947 = vmatprep.subr.mxu0 0.0
          %2948 = vmatpush1.msra.mxu0 0.0
          %2949 = vmatprep.subr.mxu0 0.0
          %2950 = vmatpush1.msra.mxu0 0.0
          %2951 = vmatprep.subr.mxu0 0.0
          %2952 = vmatpush1.msra.mxu0 0.0
          %2953 = vmatprep.subr.mxu0 0.0
          %2954 = vmatpush1.msra.mxu0 0.0
          %2955 = vmatprep.subr.mxu0 0.0
          %2956 = vmatpush1.msra.mxu0 0.0
          %2957 = vmatprep.subr.mxu0 0.0
          %2958 = vmatpush1.msra.mxu0 0.0
          %2959 = vmatprep.subr.mxu0 0.0
          %2960 = vmatpush1.msra.mxu0 0.0
          %2961 = vmatprep.subr.mxu0 0.0
          %2962 = vmatpush1.msra.mxu0 0.0
          %2963 = vmatprep.subr.mxu0 0.0
          %2964 = vmatpush1.msra.mxu0 0.0
          %2965 = vmatprep.subr.mxu0 0.0
          %2966 = vmatpush1.msra.mxu0 0.0
          %2967 = vmatprep.subr.mxu0 0.0
          %2968 = vmatpush1.msra.mxu0 0.0
          %2969 = vmatprep.subr.mxu0 0.0
          %2970 = vmatpush1.msra.mxu0 0.0
          %2971 = vmatprep.subr.mxu0 0.0
          %2972 = vmatpush1.msra.mxu0 0.0
          %2973 = vmatprep.subr.mxu0 0.0
          %2974 = vmatpush1.msra.mxu0 0.0
          %2975 = vmatprep.subr.mxu0 0.0
          %2976 = vmatpush1.msra.mxu0 0.0
          %2977 = vmatprep.mubr.f32.mxu0 0.0
          %v2978 = vand.u32 %v2608, 4294901760
          %2979 = vmatmul.mubr.f32.gmra.mrb[0].mxu0 %v2978
          %v2980 = vpop.f32.mrb[0].mxu0
          %v2981 = vadd.f32 %v2907, %v2980
          %v2982 = vpop.f32.mrb[0].mxu0
          %2983 = vdwg.mxu0
          %2984 = vmatprep.subr.mxu0 0.0
          %v2985 = vand.u32 %v2602, 4294901760
          %2986 = vmatpush1.msra.mxu0 %v2985
          %2987 = vmatprep.subr.mxu0 0.0
          %2988 = vmatpush1.msra.mxu0 0.0
          %2989 = vmatprep.subr.mxu0 0.0
          %2990 = vmatpush1.msra.mxu0 0.0
          %2991 = vmatprep.subr.mxu0 0.0
          %2992 = vmatpush1.msra.mxu0 0.0
          %2993 = vmatprep.subr.mxu0 0.0
          %2994 = vmatpush1.msra.mxu0 0.0
          %2995 = vmatprep.subr.mxu0 0.0
          %2996 = vmatpush1.msra.mxu0 0.0
          %2997 = vmatprep.subr.mxu0 0.0
          %2998 = vmatpush1.msra.mxu0 0.0
          %2999 = vmatprep.subr.mxu0 0.0
          %3000 = vmatpush1.msra.mxu0 0.0
          %3001 = vmatprep.subr.mxu0 0.0
          %3002 = vmatpush1.msra.mxu0 0.0
          %3003 = vmatprep.subr.mxu0 0.0
          %3004 = vmatpush1.msra.mxu0 0.0
          %3005 = vmatprep.subr.mxu0 0.0
          %3006 = vmatpush1.msra.mxu0 0.0
          %3007 = vmatprep.subr.mxu0 0.0
          %3008 = vmatpush1.msra.mxu0 0.0
          %3009 = vmatprep.subr.mxu0 0.0
          %3010 = vmatpush1.msra.mxu0 0.0
          %3011 = vmatprep.subr.mxu0 0.0
          %3012 = vmatpush1.msra.mxu0 0.0
          %3013 = vmatprep.subr.mxu0 0.0
          %3014 = vmatpush1.msra.mxu0 0.0
          %3015 = vmatprep.subr.mxu0 0.0
          %3016 = vmatpush1.msra.mxu0 0.0
          %3017 = vmatprep.subr.mxu0 0.0
          %3018 = vmatpush1.msra.mxu0 0.0
          %3019 = vmatprep.subr.mxu0 0.0
          %3020 = vmatpush1.msra.mxu0 0.0
          %3021 = vmatprep.subr.mxu0 0.0
          %3022 = vmatpush1.msra.mxu0 0.0
          %3023 = vmatprep.subr.mxu0 0.0
          %3024 = vmatpush1.msra.mxu0 0.0
          %3025 = vmatprep.subr.mxu0 0.0
          %3026 = vmatpush1.msra.mxu0 0.0
          %3027 = vmatprep.subr.mxu0 0.0
          %3028 = vmatpush1.msra.mxu0 0.0
          %3029 = vmatprep.subr.mxu0 0.0
          %3030 = vmatpush1.msra.mxu0 0.0
          %3031 = vmatprep.subr.mxu0 0.0
          %3032 = vmatpush1.msra.mxu0 0.0
          %3033 = vmatprep.subr.mxu0 0.0
          %3034 = vmatpush1.msra.mxu0 0.0
          %3035 = vmatprep.subr.mxu0 0.0
          %3036 = vmatpush1.msra.mxu0 0.0
          %3037 = vmatprep.subr.mxu0 0.0
          %3038 = vmatpush1.msra.mxu0 0.0
          %3039 = vmatprep.subr.mxu0 0.0
          %3040 = vmatpush1.msra.mxu0 0.0
          %3041 = vmatprep.subr.mxu0 0.0
          %3042 = vmatpush1.msra.mxu0 0.0
          %3043 = vmatprep.subr.mxu0 0.0
          %3044 = vmatpush1.msra.mxu0 0.0
          %3045 = vmatprep.subr.mxu0 0.0
          %3046 = vmatpush1.msra.mxu0 0.0
          %3047 = vmatprep.subr.mxu0 0.0
          %3048 = vmatpush1.msra.mxu0 0.0
          %3049 = vmatprep.mubr.f32.mxu0 0.0
          %v3050 = vand.u32 %v2608, 4294901760
          %3051 = vmatmul.mubr.f32.gmra.mrb[0].mxu0 %v3050
          %v3052 = vpop.f32.mrb[0].mxu0
          %v3053 = vadd.f32 %v2981, %v3052
          %v3054 = vpop.f32.mrb[0].mxu0
          %3055 = vdwg.mxu0
          %vm3056 = vcmp.ge.f32.partialorder %v3053, 10.0
          %v3057 = vsel %vm3056, 1, 0
          %v3058 = vcvt.s32.f32 %v3057
          %3059 = vst [vmem:[%s4] sm:$0xff] %v3058
        $region56: #{network_interpolation_mlp_forward.1} parent=35 // pred_fallthru
          _
        // Predicated region
        $region57: #{network_interpolation_mlp_forward.1} parent=35 // pred_check
          %p3060 = pneg %p126
        $region58: #{network_interpolation_mlp_forward.1} parent=35 // pred_check_branch
          %3062 = sbr.rel (%p3060) target = $region60
        $region59: #{network_interpolation_mlp_forward.1} parent=35 // pred_region
          _
        $region60: #{network_interpolation_mlp_forward.1} parent=35 // pred_fallthru
          _
        // Predicated region
        $region61: #{network_interpolation_mlp_forward.1} parent=35 // pred_check
          %p3063 = pneg %p126
        $region62: #{network_interpolation_mlp_forward.1} parent=35 // pred_check_branch
          %3065 = sbr.rel (%p3063) target = $region64
        $region63: #{network_interpolation_mlp_forward.1} parent=35 // pred_region
          _
        $region64: #{network_interpolation_mlp_forward.1} parent=35 // pred_fallthru
          _
      $region36: #{network_interpolation_mlp_forward.1} parent=5 // pred_fallthru
        _
      %p3066 = scmp.le.s32.totalorder 2, %s14
      // Predicated region
      $region65: #{network_interpolation_mlp_forward.1} parent=5 // pred_check
        %p3067 = pneg %p3066
      $region66: #{network_interpolation_mlp_forward.1} parent=5 // pred_check_branch
        %3069 = sbr.rel (%p3067) target = $region68
      $region67: #{network_interpolation_mlp_forward.1} parent=5 // pred_region
        %s3070 = ssub.s32 %s14, 2
      $region68: #{network_interpolation_mlp_forward.1} parent=5 // pred_fallthru
        _
    $region6: #{network_interpolation_mlp_forward.1} parent=1 // loop_footer
      %s18 = sadd.s32 1, %s14
    $region7: #{network_interpolation_mlp_forward.1} parent=1 // loop_footer_branch
      %13 = sbr.rel target = $region3
    $region8: #{network_interpolation_mlp_forward.1} parent=1 // loop_exit
      _
    %3071 = vsyncpa [#allocation4], 1
    %s3072 = scalar_lea.sflag [#allocation4], 1
    %3073 = vsyncpa %s3072, 1
    %3074 = vsyncpa [#allocation6], 1

</llo_original>
